<compile_context>
chip_gen: v7x
topology: tpu7x:2x2x1
jax: 0.10.0
libtpu: 0.0.40
codegen_flags: <defaults>
</compile_context>

<pallas_src>
import collections
import functools

import jax
import jax.numpy as jnp
from jax.experimental import pallas as pl
from jax.experimental.pallas import tpu as pltpu

BN_EPS = 1e-5
MATMUL_DTYPE = jnp.bfloat16   # MXU operand dtype (accumulation is always f32)
LANE = 128
SUBLANE = 16                  # bf16 sublane packing
MAX_TILE_M = 512

ConvMeta = collections.namedtuple(
    "ConvMeta", ["kh", "kw", "stride", "pad", "cin", "cout"])


def _round_up(x, m):
    return (x + m - 1) // m * m


# ----------------------------------------------------------------------------
# Pallas kernels: matmul -> train-mode BN -> scale/shift -> (ReLU) -> (residual)
# ----------------------------------------------------------------------------
def _conv_bn_kernel_1pass(x_ref, w_ref, gb_ref, *rest,
                          n_valid_rows, relu_out, has_residual):
    """Single grid pass: all rows are resident in one M tile, so BN statistics,
    normalization and the epilogue run on the same in-VMEM matmul result."""
    if has_residual:
        res_ref, o_ref = rest
    else:
        (o_ref,) = rest
        res_ref = None

    # MXU: bf16 x bf16 -> f32 accumulation (im2col matmul == Conv2d, bias=False)
    y = jnp.dot(x_ref[...], w_ref[...], preferred_element_type=jnp.float32)

    inv_m = 1.0 / float(n_valid_rows)          # padded rows are zero -> no bias
    mean = jnp.sum(y, axis=0, keepdims=True) * inv_m
    var = jnp.sum(y * y, axis=0, keepdims=True) * inv_m - mean * mean
    inv_std = jax.lax.rsqrt(var + BN_EPS)
    a = gb_ref[0:1, :] * inv_std               # gamma * inv_std
    b = gb_ref[1:2, :] - mean * a              # beta  - mean * a
    out = y * a + b
    if relu_out:
        out = jnp.maximum(out, 0.0)
    if has_residual:
        out = out + res_ref[...]
    o_ref[...] = out


def _conv_bn_kernel_2phase(x_ref, w_ref, gb_ref, *rest,
                           n_valid_rows, relu_out, has_residual):
    """grid = (channel tiles [parallel], phase [arbitrary], row tiles [arbitrary])
    phase 0: matmul + per-channel sum / sum-of-squares into VMEM scratch.
    phase 1: matmul recompute + fold BN/affine into scale/shift + epilogue."""
    if has_residual:
        res_ref, o_ref, sum_ref, sq_ref = rest
    else:
        o_ref, sum_ref, sq_ref = rest
        res_ref = None

    phase = pl.program_id(1)
    m_idx = pl.program_id(2)

    y = jnp.dot(x_ref[...], w_ref[...], preferred_element_type=jnp.float32)

    @pl.when(jnp.logical_and(phase == 0, m_idx == 0))
    def _():
        sum_ref[...] = jnp.zeros_like(sum_ref)
        sq_ref[...] = jnp.zeros_like(sq_ref)

    @pl.when(phase == 0)
    def _():
        sum_ref[...] += jnp.sum(y, axis=0, keepdims=True)
        sq_ref[...] += jnp.sum(y * y, axis=0, keepdims=True)

    @pl.when(phase == 1)
    def _():
        inv_m = 1.0 / float(n_valid_rows)
        mean = sum_ref[...] * inv_m
        var = sq_ref[...] * inv_m - mean * mean      # biased (PyTorch train mode)
        inv_std = jax.lax.rsqrt(var + BN_EPS)
        a = gb_ref[0:1, :] * inv_std
        b = gb_ref[1:2, :] - mean * a
        out = y * a + b
        if relu_out:
            out = jnp.maximum(out, 0.0)
        if has_residual:
            out = out + res_ref[...]
        o_ref[...] = out


def _fused_conv_bn(xm, wm, gb, residual, *, relu_out):
    """xm: (M, K) im2col matrix (MATMUL_DTYPE). wm: (Kp, Np) prebaked bf16
    weights. gb: (2, Np) packed gamma/beta (f32). Returns (Mp, Np) f32."""
    M, K = xm.shape
    Kp, Np = wm.shape

    # M tiling: single block when small, MAX_TILE_M-row tiles otherwise.
    tile_m = MAX_TILE_M if M > MAX_TILE_M else _round_up(M, SUBLANE)
    Mp = _round_up(M, tile_m)
    # Channel tiling: feed the 256-wide v6e/v7x MXU full tiles when possible.
    tile_n = 256 if Np % 256 == 0 else LANE
    n_tiles_n = Np // tile_n

    xp = jnp.pad(xm, ((0, Mp - M), (0, Kp - K)))
    has_residual = residual is not None
    if has_residual:
        rM, rN = residual.shape
        # Residual stays f32: its traffic is K/Cout-times smaller than the
        # matmul operands and it protects the residual-chain accuracy.
        rp = jnp.pad(residual, ((0, Mp - rM), (0, Np - rN)))

    vmem_params = pltpu.CompilerParams(
        dimension_semantics=("parallel",) if Mp == tile_m
        else ("parallel", "arbitrary", "arbitrary"),
        vmem_limit_bytes=48 * 1024 * 1024)

    if Mp == tile_m:
        # --------- single-pass path: one grid sweep, no matmul recompute -----
        inputs = [xp, wm, gb]
        in_specs = [
            pl.BlockSpec((tile_m, Kp), lambda nj: (0, 0)),     # activations
            pl.BlockSpec((Kp, tile_n), lambda nj: (0, nj)),    # weights
            pl.BlockSpec((2, tile_n), lambda nj: (0, nj)),     # gamma/beta
        ]
        if has_residual:
            inputs.append(rp)
            in_specs.append(pl.BlockSpec((tile_m, tile_n), lambda nj: (0, nj)))
        kernel = functools.partial(
            _conv_bn_kernel_1pass, n_valid_rows=M, relu_out=relu_out,
            has_residual=has_residual)
        return pl.pallas_call(
            kernel,
            out_shape=jax.ShapeDtypeStruct((Mp, Np), jnp.float32),
            grid=(n_tiles_n,),
            in_specs=in_specs,
            out_specs=pl.BlockSpec((tile_m, tile_n), lambda nj: (0, nj)),
            compiler_params=vmem_params,
        )(*inputs)

    # ------------- two-phase path: M tiled, exact BN under tiling ------------
    inputs = [xp, wm, gb]
    in_specs = [
        pl.BlockSpec((tile_m, Kp), lambda nj, p, m: (m, 0)),    # activations
        pl.BlockSpec((Kp, tile_n), lambda nj, p, m: (0, nj)),   # weights (resident)
        pl.BlockSpec((2, tile_n), lambda nj, p, m: (0, nj)),    # packed gamma/beta
    ]
    if has_residual:
        inputs.append(rp)
        # Park on block (0, nj) during the stats phase (p == 0): the residual is
        # only read in phase 1, so this avoids useless phase-0 fetches.
        in_specs.append(
            pl.BlockSpec((tile_m, tile_n), lambda nj, p, m: (m * p, nj)))

    kernel = functools.partial(
        _conv_bn_kernel_2phase, n_valid_rows=M, relu_out=relu_out,
        has_residual=has_residual)

    grid = (n_tiles_n, 2, Mp // tile_m)   # (channel tiles, phase, row tiles)
    return pl.pallas_call(
        kernel,
        out_shape=jax.ShapeDtypeStruct((Mp, Np), jnp.float32),
        grid=grid,
        in_specs=in_specs,
        # Output also parks on (0, nj) during phase 0 (never written there), so
        # phase 0 issues no garbage writebacks; phase 1 streams the real tiles.
        out_specs=pl.BlockSpec((tile_m, tile_n), lambda nj, p, m: (m * p, nj)),
        scratch_shapes=[pltpu.VMEM((1, tile_n), jnp.float32),
                        pltpu.VMEM((1, tile_n), jnp.float32)],
        compiler_params=vmem_params,
    )(*inputs)


# ----------------------------------------------------------------------------
# Plain-JAX glue: im2col patch extraction & per-layer wrapper
# ----------------------------------------------------------------------------
def _im2col(x_nhwc, kh, kw, stride, pad):
    if pad:
        x_nhwc = jnp.pad(x_nhwc, ((0, 0), (pad, pad), (pad, pad), (0, 0)))
    n, hp, wp, _ = x_nhwc.shape
    ho = (hp - kh) // stride + 1
    wo = (wp - kw) // stride + 1
    cols = []
    for i in range(kh):
        for j in range(kw):
            cols.append(
                x_nhwc[:, i:i + stride * (ho - 1) + 1:stride,
                       j:j + stride * (wo - 1) + 1:stride, :])
    return jnp.concatenate(cols, axis=-1), ho, wo   # (N, Ho, Wo, kh*kw*C)


def conv_bn_act(x_nhwc, wm, gb, meta, *, relu_out=True, residual_nhwc=None):
    n = int(x_nhwc.shape[0])
    cols, ho, wo = _im2col(x_nhwc.astype(MATMUL_DTYPE),
                           meta.kh, meta.kw, meta.stride, meta.pad)
    m = n * ho * wo
    k = meta.kh * meta.kw * meta.cin
    xm = cols.reshape(m, k)
    resm = (residual_nhwc.reshape(m, meta.cout).astype(jnp.float32)
            if residual_nhwc is not None else None)
    out = _fused_conv_bn(xm, wm, gb, resm, relu_out=relu_out)
    return out[:m, :meta.cout].reshape(n, ho, wo, meta.cout)


# ----------------------------------------------------------------------------
# One-time parameter prebake (transpose/pad/cast weights, pack gamma/beta)
# ----------------------------------------------------------------------------
def _prepare_conv(w_oihw, gamma, beta, *, stride, pad):
    cout, cin, kh, kw = (int(s) for s in w_oihw.shape)
    k = kh * kw * cin
    kp = _round_up(k, LANE)
    np_pad = _round_up(cout, LANE)
    # OIHW -> (KH, KW, Cin, Cout) -> (K, Cout); matches im2col column order.
    wm = jnp.transpose(w_oihw, (2, 3, 1, 0)).reshape(k, cout)
    wm = jnp.pad(wm, ((0, kp - k), (0, np_pad - cout))).astype(MATMUL_DTYPE)
    gb = jnp.pad(jnp.stack([gamma, beta], axis=0).astype(jnp.float32),
                 ((0, 0), (0, np_pad - cout)))
    return wm, gb, ConvMeta(kh, kw, stride, pad, cin, cout)


def prepare_params(raw):
    weights = {"down": [], "res": []}
    metas = {"down": [], "res": []}
    for (w, g, b) in raw["down"]:
        wm, gb, meta = _prepare_conv(w, g, b, stride=2, pad=1)
        weights["down"].append((wm, gb))
        metas["down"].append(meta)
    for (w1, g1, b1, w2, g2, b2) in raw["res"]:
        wm1, gb1, m1 = _prepare_conv(w1, g1, b1, stride=1, pad=1)
        wm2, gb2, m2 = _prepare_conv(w2, g2, b2, stride=1, pad=0)
        weights["res"].append((wm1, gb1, wm2, gb2))
        metas["res"].append((m1, m2))
    return weights, metas


# ----------------------------------------------------------------------------
# Encoder: downsample stack + residual blocks (metas static via closure, jit'd)
# ----------------------------------------------------------------------------
def make_encoder_forward(metas):
    def forward(x_nchw, weights):
        x = jnp.transpose(x_nchw, (0, 2, 3, 1)).astype(jnp.float32)  # NHWC
        for (wm, gb), meta in zip(weights["down"], metas["down"]):
            x = conv_bn_act(x, wm, gb, meta, relu_out=True)
        for (wm1, gb1, wm2, gb2), (m1, m2) in zip(weights["res"], metas["res"]):
            # pre-activation ReLU on the compact NHWC tensor, NOT the im2col matrix
            h = conv_bn_act(jax.nn.relu(x), wm1, gb1, m1, relu_out=True)
            x = conv_bn_act(h, wm2, gb2, m2, relu_out=False, residual_nhwc=x)
        return jnp.transpose(x, (0, 3, 1, 2))  # back to NCHW
    return jax.jit(forward)


def init_params(key, in_channels, hidden_dims, n_residual_blocks):
    params = {"down": [], "res": []}
    chans = [in_channels] + list(hidden_dims)
    for idx in range(len(hidden_dims)):
        key, k1, k2, k3 = jax.random.split(key, 4)
        cin, cout = chans[idx], chans[idx + 1]
        w = jax.random.normal(k1, (cout, cin, 4, 4), jnp.float32) * jnp.sqrt(2.0 / (cin * 16))
        g = 1.0 + 0.05 * jax.random.normal(k2, (cout,), jnp.float32)
        b = 0.05 * jax.random.normal(k3, (cout,), jnp.float32)
        params["down"].append((w, g, b))
    c = hidden_dims[-1]
    hid = c // 4
    for _ in range(n_residual_blocks):
        key, k1, k2, k3, k4, k5, k6 = jax.random.split(key, 7)
        w1 = jax.random.normal(k1, (hid, c, 3, 3), jnp.float32) * jnp.sqrt(2.0 / (c * 9))
        g1 = 1.0 + 0.05 * jax.random.normal(k2, (hid,), jnp.float32)
        b1 = 0.05 * jax.random.normal(k3, (hid,), jnp.float32)
        w2 = jax.random.normal(k4, (c, hid, 1, 1), jnp.float32) * jnp.sqrt(2.0 / hid)
        g2 = 1.0 + 0.05 * jax.random.normal(k5, (c,), jnp.float32)
        b2 = 0.05 * jax.random.normal(k6, (c,), jnp.float32)
        params["res"].append((w1, g1, b1, w2, g2, b2))
    return params


# ----------------------------------------------------------------------------
# Pure-JAX references (for correctness checks)
# ----------------------------------------------------------------------------
def _ref_conv(x, w, stride, pad, operand_dtype):
    return jax.lax.conv_general_dilated(
        x.astype(operand_dtype), w.astype(operand_dtype),
        (stride, stride), [(pad, pad), (pad, pad)],
        dimension_numbers=("NCHW", "OIHW", "NCHW"),
        preferred_element_type=jnp.float32,
        precision=jax.lax.Precision.HIGHEST)


def _ref_bn(y, g, b):
    mean = jnp.mean(y, axis=(0, 2, 3), keepdims=True)
    var = jnp.mean((y - mean) ** 2, axis=(0, 2, 3), keepdims=True)
    return ((y - mean) / jnp.sqrt(var + BN_EPS) * g[None, :, None, None]
            + b[None, :, None, None])


def _ref_layer_nhwc(x_nhwc, w, g, b, stride, pad, relu_out,
                    residual_nhwc=None, operand_dtype=MATMUL_DTYPE):
    """Single conv+BN(+ReLU)(+residual) layer in plain JAX, NHWC in/out."""
    x_nchw = jnp.transpose(x_nhwc, (0, 3, 1, 2))
    y = _ref_bn(_ref_conv(x_nchw, w, stride, pad, operand_dtype), g, b)
    if relu_out:
        y = jax.nn.relu(y)
    y = jnp.transpose(y, (0, 2, 3, 1))
    if residual_nhwc is not None:
        y = y + residual_nhwc
    return y


def encoder_reference(x, params, operand_dtype=jnp.float32):
    """PyTorch-equivalent chained reference (conv operand precision selectable)."""
    x = x.astype(jnp.float32)
    for (w, g, b) in params["down"]:
        x = jax.nn.relu(_ref_bn(_ref_conv(x, w, 2, 1, operand_dtype), g, b))
    for (w1, g1, b1, w2, g2, b2) in params["res"]:
        h = jax.nn.relu(x)
        h = jax.nn.relu(_ref_bn(_ref_conv(h, w1, 1, 1, operand_dtype), g1, b1))
        h = _ref_bn(_ref_conv(h, w2, 1, 0, operand_dtype), g2, b2)
        x = x + h
    return x


def check_layerwise(x_nchw, raw, weights, metas, tol):
    """Layer-isolated matched-precision check: every Pallas layer and its
    bf16-operand JAX reference consume the SAME input (the Pallas chain), so the
    comparison reflects single-layer kernel numerics only and cannot be
    contaminated by bf16 chaining divergence."""
    x = jnp.transpose(x_nchw, (0, 2, 3, 1)).astype(jnp.float32)
    errs = []
    for (w, g, b), (wm, gb), meta in zip(raw["down"], weights["down"],
                                         metas["down"]):
        out_k = conv_bn_act(x, wm, gb, meta, relu_out=True)
        out_r = _ref_layer_nhwc(x, w, g, b, meta.stride, meta.pad, True)
        errs.append(float(jnp.max(jnp.abs(out_k - out_r))))
        x = out_k
    for (w1, g1, b1, w2, g2, b2), (wm1, gb1, wm2, gb2), (m1, m2) in zip(
            raw["res"], weights["res"], metas["res"]):
        xin = jax.nn.relu(x)
        h_k = conv_bn_act(xin, wm1, gb1, m1, relu_out=True)
        h_r = _ref_layer_nhwc(xin, w1, g1, b1, 1, 1, True)
        errs.append(float(jnp.max(jnp.abs(h_k - h_r))))
        o_k = conv_bn_act(h_k, wm2, gb2, m2, relu_out=False, residual_nhwc=x)
        o_r = _ref_layer_nhwc(h_k, w2, g2, b2, 1, 0, False, residual_nhwc=x)
        errs.append(float(jnp.max(jnp.abs(o_k - o_r))))
        x = o_k
    max_err = max(errs)
    assert max_err < tol, f"per-layer max abs err {max_err} (errs={errs})"
    return x, max_err


if __name__ == "__main__":
    in_channels = 4
    hidden_dims = [32, 64]
    n_residual_blocks = 2

    key = jax.random.PRNGKey(0)
    kx, kp, kt = jax.random.split(key, 3)
    x = jax.random.normal(kx, (2, in_channels, 16, 16), jnp.float32)
    raw_params = init_params(kp, in_channels, hidden_dims, n_residual_blocks)

    weights, metas = prepare_params(raw_params)      # one-time weight prebake
    encoder = make_encoder_forward(metas)

    out = jax.block_until_ready(encoder(x, weights))
    assert out.shape == (2, hidden_dims[-1], 4, 4), out.shape

    # (1) Tight, layer-isolated matched-precision check (bf16 conv operands,
    #     f32 accumulation & BN): validates conv layout, train-mode BN, the
    #     scale/shift fold, ReLU and the residual add per layer.
    x_chain, _ = check_layerwise(x, raw_params, weights, metas, tol=5e-3)

    # (2) The jitted end-to-end encoder must reproduce the eager layer chain.
    e2e_err = float(jnp.max(jnp.abs(out - jnp.transpose(x_chain, (0, 3, 1, 2)))))
    assert e2e_err < 1e-4, f"jit vs eager chain mismatch: {e2e_err}"

    # (3) Direct unit test of the two-phase multi-row-tile path (M, K and Cout
    #     all padded) against a plain bf16-operand matmul + train-mode BN + ReLU.
    tM, tK, tC = 1200, 96, 160
    k1, k2, k3, k4 = jax.random.split(kt, 4)
    xm_t = jax.random.normal(k1, (tM, tK), jnp.float32)
    w_t = jax.random.normal(k2, (tK, tC), jnp.float32) / jnp.sqrt(float(tK))
    g_t = 1.0 + 0.05 * jax.random.normal(k3, (tC,), jnp.float32)
    b_t = 0.05 * jax.random.normal(k4, (tC,), jnp.float32)
    Kp_t, Np_t = _round_up(tK, LANE), _round_up(tC, LANE)
    wm_t = jnp.pad(w_t, ((0, Kp_t - tK), (0, Np_t - tC))).astype(MATMUL_DTYPE)
    gb_t = jnp.pad(jnp.stack([g_t, b_t], axis=0), ((0, 0), (0, Np_t - tC)))
    out_t = _fused_conv_bn(xm_t.astype(MATMUL_DTYPE), wm_t, gb_t, None,
                           relu_out=True)[:tM, :tC]
    y_t = jnp.dot(xm_t.astype(MATMUL_DTYPE), w_t.astype(MATMUL_DTYPE),
                  preferred_element_type=jnp.float32)
    mu_t = jnp.mean(y_t, axis=0, keepdims=True)
    var_t = jnp.mean((y_t - mu_t) ** 2, axis=0, keepdims=True)
    ref_t = jnp.maximum((y_t - mu_t) * jax.lax.rsqrt(var_t + BN_EPS) * g_t + b_t, 0.0)
    err_t = float(jnp.max(jnp.abs(out_t - ref_t)))
    assert err_t < 5e-3, f"two-phase path max abs err too large: {err_t}"

    # (4) Loose end-to-end sanity vs the full-f32 reference.  bf16 operand
    #     rounding compounds across 6 conv+BN layers and the residual stream,
    #     so this is a catastrophe detector, not a precision statement.
    ref_f32 = encoder_reference(x, raw_params, operand_dtype=jnp.float32)
    err_f32 = float(jnp.max(jnp.abs(out - ref_f32)))
    scale_f32 = float(jnp.max(jnp.abs(ref_f32)))
    assert err_f32 < max(0.25, 0.1 * scale_f32), \
        f"f32-reference sanity check failed: err={err_f32}, scale={scale_f32}"

    print("KERNEL_OK")
</pallas_src>

<mosaic_0001>
module attributes {stable_mosaic.version = 11 : i64} {
  func.func @_conv_bn_kernel_1pass(%arg0: i32, %arg1: memref<128x128xbf16, #tpu.memory_space<vmem>>, %arg2: memref<128x128xbf16, #tpu.memory_space<vmem>>, %arg3: memref<2x128xf32, #tpu.memory_space<vmem>>, %arg4: memref<128x128xf32, #tpu.memory_space<vmem>>) attributes {dimension_semantics = [#tpu.dimension_semantics<parallel>], iteration_bounds = array<i64: 1>, scalar_prefetch = 0 : i64, scratch_operands = 0 : i64, tpu.core_type = #tpu.core_type<tc>, window_params = [{pipeline_mode = #tpu.pipeline_mode<synchronous>, transform_indices = @transform_0, window_bounds = array<i64: 128, 128>}, {transform_indices = @transform_1, window_bounds = array<i64: 128, 128>}, {transform_indices = @transform_2, window_bounds = array<i64: 2, 128>}, {transform_indices = @transform_3, window_bounds = array<i64: 128, 128>}]} {
    %c0 = arith.constant 0 : index
    %c0_0 = arith.constant 0 : index
    %0 = vector.load %arg1[%c0, %c0_0] : memref<128x128xbf16, #tpu.memory_space<vmem>>, vector<128x128xbf16>
    %c0_1 = arith.constant 0 : index
    %c0_2 = arith.constant 0 : index
    %1 = vector.load %arg2[%c0_1, %c0_2] : memref<128x128xbf16, #tpu.memory_space<vmem>>, vector<128x128xbf16>
    %cst = arith.constant dense<0.000000e+00> : vector<128x128xf32>
    %2 = tpu.matmul %0, %1, %cst {dimension_numbers = #tpu.dot_dimension_numbers<[1], [0], [0], [1], [0, 0, 1, 1], [], []>} : vector<128x128xbf16>, vector<128x128xbf16>, vector<128x128xf32> -> vector<128x128xf32>
    %cst_3 = arith.constant dense<0.000000e+00> : vector<128xf32>
    %3 = vector.multi_reduction <add>, %2, %cst_3 [0] : vector<128x128xf32> to vector<128xf32>
    %4 = vector.shape_cast %3 : vector<128xf32> to vector<1x128xf32>
    %cst_4 = arith.constant 7.812500e-03 : f32
    %5 = vector.broadcast %cst_4 : f32 to vector<1x128xf32>
    %6 = arith.mulf %4, %5 : vector<1x128xf32>
    %7 = arith.mulf %2, %2 : vector<128x128xf32>
    %cst_5 = arith.constant dense<0.000000e+00> : vector<128xf32>
    %8 = vector.multi_reduction <add>, %7, %cst_5 [0] : vector<128x128xf32> to vector<128xf32>
    %9 = vector.shape_cast %8 : vector<128xf32> to vector<1x128xf32>
    %cst_6 = arith.constant 7.812500e-03 : f32
    %10 = vector.broadcast %cst_6 : f32 to vector<1x128xf32>
    %11 = arith.mulf %9, %10 : vector<1x128xf32>
    %12 = arith.mulf %6, %6 : vector<1x128xf32>
    %13 = arith.subf %11, %12 : vector<1x128xf32>
    %cst_7 = arith.constant 9.99999974E-6 : f32
    %14 = vector.broadcast %cst_7 : f32 to vector<1x128xf32>
    %15 = arith.addf %13, %14 : vector<1x128xf32>
    %16 = math.rsqrt %15 : vector<1x128xf32>
    %c0_8 = arith.constant 0 : index
    %c0_9 = arith.constant 0 : index
    %17 = vector.load %arg3[%c0_8, %c0_9] : memref<2x128xf32, #tpu.memory_space<vmem>>, vector<1x128xf32>
    %18 = arith.mulf %17, %16 : vector<1x128xf32>
    %c1 = arith.constant 1 : index
    %c0_10 = arith.constant 0 : index
    %19 = vector.load %arg3[%c1, %c0_10] : memref<2x128xf32, #tpu.memory_space<vmem>>, vector<1x128xf32>
    %20 = arith.mulf %6, %18 : vector<1x128xf32>
    %21 = arith.subf %19, %20 : vector<1x128xf32>
    %22 = vector.broadcast %18 : vector<1x128xf32> to vector<128x128xf32>
    %23 = arith.mulf %2, %22 : vector<128x128xf32>
    %24 = vector.broadcast %21 : vector<1x128xf32> to vector<128x128xf32>
    %25 = arith.addf %23, %24 : vector<128x128xf32>
    %cst_11 = arith.constant 0.000000e+00 : f32
    %26 = vector.broadcast %cst_11 : f32 to vector<128x128xf32>
    %27 = arith.maximumf %25, %26 : vector<128x128xf32>
    %c0_12 = arith.constant 0 : index
    %c0_13 = arith.constant 0 : index
    %28 = vector.load %arg4[%c0_12, %c0_13] : memref<128x128xf32, #tpu.memory_space<vmem>>, vector<128x128xf32>
    tpu.vector_store %arg4[%c0_12, %c0_13], %27 {strides = array<i32>} : memref<128x128xf32, #tpu.memory_space<vmem>>, vector<128x128xf32>,
    return
  }
  func.func @transform_0(%arg0: i32) -> (i32, i32) {
    %c0_i32 = arith.constant 0 : i32
    %c0_i32_0 = arith.constant 0 : i32
    %c0_i32_1 = arith.constant 0 : i32
    return %c0_i32, %c0_i32_0 : i32, i32
  }
  func.func @transform_1(%arg0: i32) -> (i32, i32) {
    %c0_i32 = arith.constant 0 : i32
    %c0_i32_0 = arith.constant 0 : i32
    return %c0_i32, %arg0 : i32, i32
  }
  func.func @transform_2(%arg0: i32) -> (i32, i32) {
    %c0_i32 = arith.constant 0 : i32
    %c0_i32_0 = arith.constant 0 : i32
    return %c0_i32, %arg0 : i32, i32
  }
  func.func @transform_3(%arg0: i32) -> (i32, i32) {
    %c0_i32 = arith.constant 0 : i32
    %c0_i32_0 = arith.constant 0 : i32
    return %c0_i32, %arg0 : i32, i32
  }
}

module attributes {stable_mosaic.version = 11 : i64} {
  func.func @_conv_bn_kernel_1pass(%arg0: i32, %arg1: memref<32x512xbf16, #tpu.memory_space<vmem>>, %arg2: memref<512x128xbf16, #tpu.memory_space<vmem>>, %arg3: memref<2x128xf32, #tpu.memory_space<vmem>>, %arg4: memref<32x128xf32, #tpu.memory_space<vmem>>) attributes {dimension_semantics = [#tpu.dimension_semantics<parallel>], iteration_bounds = array<i64: 1>, scalar_prefetch = 0 : i64, scratch_operands = 0 : i64, tpu.core_type = #tpu.core_type<tc>, window_params = [{pipeline_mode = #tpu.pipeline_mode<synchronous>, transform_indices = @transform_0, window_bounds = array<i64: 32, 512>}, {transform_indices = @transform_1, window_bounds = array<i64: 512, 128>}, {transform_indices = @transform_2, window_bounds = array<i64: 2, 128>}, {transform_indices = @transform_3, window_bounds = array<i64: 32, 128>}]} {
    %c0 = arith.constant 0 : index
    %c0_0 = arith.constant 0 : index
    %0 = vector.load %arg1[%c0, %c0_0] : memref<32x512xbf16, #tpu.memory_space<vmem>>, vector<32x512xbf16>
    %c0_1 = arith.constant 0 : index
    %c0_2 = arith.constant 0 : index
    %1 = vector.load %arg2[%c0_1, %c0_2] : memref<512x128xbf16, #tpu.memory_space<vmem>>, vector<512x128xbf16>
    %cst = arith.constant dense<0.000000e+00> : vector<32x128xf32>
    %2 = tpu.matmul %0, %1, %cst {dimension_numbers = #tpu.dot_dimension_numbers<[1], [0], [0], [1], [0, 0, 1, 1], [], []>} : vector<32x512xbf16>, vector<512x128xbf16>, vector<32x128xf32> -> vector<32x128xf32>
    %cst_3 = arith.constant dense<0.000000e+00> : vector<128xf32>
    %3 = vector.multi_reduction <add>, %2, %cst_3 [0] : vector<32x128xf32> to vector<128xf32>
    %4 = vector.shape_cast %3 : vector<128xf32> to vector<1x128xf32>
    %cst_4 = arith.constant 3.125000e-02 : f32
    %5 = vector.broadcast %cst_4 : f32 to vector<1x128xf32>
    %6 = arith.mulf %4, %5 : vector<1x128xf32>
    %7 = arith.mulf %2, %2 : vector<32x128xf32>
    %cst_5 = arith.constant dense<0.000000e+00> : vector<128xf32>
    %8 = vector.multi_reduction <add>, %7, %cst_5 [0] : vector<32x128xf32> to vector<128xf32>
    %9 = vector.shape_cast %8 : vector<128xf32> to vector<1x128xf32>
    %cst_6 = arith.constant 3.125000e-02 : f32
    %10 = vector.broadcast %cst_6 : f32 to vector<1x128xf32>
    %11 = arith.mulf %9, %10 : vector<1x128xf32>
    %12 = arith.mulf %6, %6 : vector<1x128xf32>
    %13 = arith.subf %11, %12 : vector<1x128xf32>
    %cst_7 = arith.constant 9.99999974E-6 : f32
    %14 = vector.broadcast %cst_7 : f32 to vector<1x128xf32>
    %15 = arith.addf %13, %14 : vector<1x128xf32>
    %16 = math.rsqrt %15 : vector<1x128xf32>
    %c0_8 = arith.constant 0 : index
    %c0_9 = arith.constant 0 : index
    %17 = vector.load %arg3[%c0_8, %c0_9] : memref<2x128xf32, #tpu.memory_space<vmem>>, vector<1x128xf32>
    %18 = arith.mulf %17, %16 : vector<1x128xf32>
    %c1 = arith.constant 1 : index
    %c0_10 = arith.constant 0 : index
    %19 = vector.load %arg3[%c1, %c0_10] : memref<2x128xf32, #tpu.memory_space<vmem>>, vector<1x128xf32>
    %20 = arith.mulf %6, %18 : vector<1x128xf32>
    %21 = arith.subf %19, %20 : vector<1x128xf32>
    %22 = vector.broadcast %18 : vector<1x128xf32> to vector<32x128xf32>
    %23 = arith.mulf %2, %22 : vector<32x128xf32>
    %24 = vector.broadcast %21 : vector<1x128xf32> to vector<32x128xf32>
    %25 = arith.addf %23, %24 : vector<32x128xf32>
    %cst_11 = arith.constant 0.000000e+00 : f32
    %26 = vector.broadcast %cst_11 : f32 to vector<32x128xf32>
    %27 = arith.maximumf %25, %26 : vector<32x128xf32>
    %c0_12 = arith.constant 0 : index
    %c0_13 = arith.constant 0 : index
    %28 = vector.load %arg4[%c0_12, %c0_13] : memref<32x128xf32, #tpu.memory_space<vmem>>, vector<32x128xf32>
    tpu.vector_store %arg4[%c0_12, %c0_13], %27 {strides = array<i32>} : memref<32x128xf32, #tpu.memory_space<vmem>>, vector<32x128xf32>,
    return
  }
  func.func @transform_0(%arg0: i32) -> (i32, i32) {
    %c0_i32 = arith.constant 0 : i32
    %c0_i32_0 = arith.constant 0 : i32
    %c0_i32_1 = arith.constant 0 : i32
    return %c0_i32, %c0_i32_0 : i32, i32
  }
  func.func @transform_1(%arg0: i32) -> (i32, i32) {
    %c0_i32 = arith.constant 0 : i32
    %c0_i32_0 = arith.constant 0 : i32
    return %c0_i32, %arg0 : i32, i32
  }
  func.func @transform_2(%arg0: i32) -> (i32, i32) {
    %c0_i32 = arith.constant 0 : i32
    %c0_i32_0 = arith.constant 0 : i32
    return %c0_i32, %arg0 : i32, i32
  }
  func.func @transform_3(%arg0: i32) -> (i32, i32) {
    %c0_i32 = arith.constant 0 : i32
    %c0_i32_0 = arith.constant 0 : i32
    return %c0_i32, %arg0 : i32, i32
  }
}

module attributes {stable_mosaic.version = 11 : i64} {
  func.func @_conv_bn_kernel_1pass(%arg0: i32, %arg1: memref<32x640xbf16, #tpu.memory_space<vmem>>, %arg2: memref<640x128xbf16, #tpu.memory_space<vmem>>, %arg3: memref<2x128xf32, #tpu.memory_space<vmem>>, %arg4: memref<32x128xf32, #tpu.memory_space<vmem>>) attributes {dimension_semantics = [#tpu.dimension_semantics<parallel>], iteration_bounds = array<i64: 1>, scalar_prefetch = 0 : i64, scratch_operands = 0 : i64, tpu.core_type = #tpu.core_type<tc>, window_params = [{pipeline_mode = #tpu.pipeline_mode<synchronous>, transform_indices = @transform_0, window_bounds = array<i64: 32, 640>}, {transform_indices = @transform_1, window_bounds = array<i64: 640, 128>}, {transform_indices = @transform_2, window_bounds = array<i64: 2, 128>}, {transform_indices = @transform_3, window_bounds = array<i64: 32, 128>}]} {
    %c0 = arith.constant 0 : index
    %c0_0 = arith.constant 0 : index
    %0 = vector.load %arg1[%c0, %c0_0] : memref<32x640xbf16, #tpu.memory_space<vmem>>, vector<32x640xbf16>
    %c0_1 = arith.constant 0 : index
    %c0_2 = arith.constant 0 : index
    %1 = vector.load %arg2[%c0_1, %c0_2] : memref<640x128xbf16, #tpu.memory_space<vmem>>, vector<640x128xbf16>
    %cst = arith.constant dense<0.000000e+00> : vector<32x128xf32>
    %2 = tpu.matmul %0, %1, %cst {dimension_numbers = #tpu.dot_dimension_numbers<[1], [0], [0], [1], [0, 0, 1, 1], [], []>} : vector<32x640xbf16>, vector<640x128xbf16>, vector<32x128xf32> -> vector<32x128xf32>
    %cst_3 = arith.constant dense<0.000000e+00> : vector<128xf32>
    %3 = vector.multi_reduction <add>, %2, %cst_3 [0] : vector<32x128xf32> to vector<128xf32>
    %4 = vector.shape_cast %3 : vector<128xf32> to vector<1x128xf32>
    %cst_4 = arith.constant 3.125000e-02 : f32
    %5 = vector.broadcast %cst_4 : f32 to vector<1x128xf32>
    %6 = arith.mulf %4, %5 : vector<1x128xf32>
    %7 = arith.mulf %2, %2 : vector<32x128xf32>
    %cst_5 = arith.constant dense<0.000000e+00> : vector<128xf32>
    %8 = vector.multi_reduction <add>, %7, %cst_5 [0] : vector<32x128xf32> to vector<128xf32>
    %9 = vector.shape_cast %8 : vector<128xf32> to vector<1x128xf32>
    %cst_6 = arith.constant 3.125000e-02 : f32
    %10 = vector.broadcast %cst_6 : f32 to vector<1x128xf32>
    %11 = arith.mulf %9, %10 : vector<1x128xf32>
    %12 = arith.mulf %6, %6 : vector<1x128xf32>
    %13 = arith.subf %11, %12 : vector<1x128xf32>
    %cst_7 = arith.constant 9.99999974E-6 : f32
    %14 = vector.broadcast %cst_7 : f32 to vector<1x128xf32>
    %15 = arith.addf %13, %14 : vector<1x128xf32>
    %16 = math.rsqrt %15 : vector<1x128xf32>
    %c0_8 = arith.constant 0 : index
    %c0_9 = arith.constant 0 : index
    %17 = vector.load %arg3[%c0_8, %c0_9] : memref<2x128xf32, #tpu.memory_space<vmem>>, vector<1x128xf32>
    %18 = arith.mulf %17, %16 : vector<1x128xf32>
    %c1 = arith.constant 1 : index
    %c0_10 = arith.constant 0 : index
    %19 = vector.load %arg3[%c1, %c0_10] : memref<2x128xf32, #tpu.memory_space<vmem>>, vector<1x128xf32>
    %20 = arith.mulf %6, %18 : vector<1x128xf32>
    %21 = arith.subf %19, %20 : vector<1x128xf32>
    %22 = vector.broadcast %18 : vector<1x128xf32> to vector<32x128xf32>
    %23 = arith.mulf %2, %22 : vector<32x128xf32>
    %24 = vector.broadcast %21 : vector<1x128xf32> to vector<32x128xf32>
    %25 = arith.addf %23, %24 : vector<32x128xf32>
    %cst_11 = arith.constant 0.000000e+00 : f32
    %26 = vector.broadcast %cst_11 : f32 to vector<32x128xf32>
    %27 = arith.maximumf %25, %26 : vector<32x128xf32>
    %c0_12 = arith.constant 0 : index
    %c0_13 = arith.constant 0 : index
    %28 = vector.load %arg4[%c0_12, %c0_13] : memref<32x128xf32, #tpu.memory_space<vmem>>, vector<32x128xf32>
    tpu.vector_store %arg4[%c0_12, %c0_13], %27 {strides = array<i32>} : memref<32x128xf32, #tpu.memory_space<vmem>>, vector<32x128xf32>,
    return
  }
  func.func @transform_0(%arg0: i32) -> (i32, i32) {
    %c0_i32 = arith.constant 0 : i32
    %c0_i32_0 = arith.constant 0 : i32
    %c0_i32_1 = arith.constant 0 : i32
    return %c0_i32, %c0_i32_0 : i32, i32
  }
  func.func @transform_1(%arg0: i32) -> (i32, i32) {
    %c0_i32 = arith.constant 0 : i32
    %c0_i32_0 = arith.constant 0 : i32
    return %c0_i32, %arg0 : i32, i32
  }
  func.func @transform_2(%arg0: i32) -> (i32, i32) {
    %c0_i32 = arith.constant 0 : i32
    %c0_i32_0 = arith.constant 0 : i32
    return %c0_i32, %arg0 : i32, i32
  }
  func.func @transform_3(%arg0: i32) -> (i32, i32) {
    %c0_i32 = arith.constant 0 : i32
    %c0_i32_0 = arith.constant 0 : i32
    return %c0_i32, %arg0 : i32, i32
  }
}

module attributes {stable_mosaic.version = 11 : i64} {
  func.func @_conv_bn_kernel_1pass(%arg0: i32, %arg1: memref<32x128xbf16, #tpu.memory_space<vmem>>, %arg2: memref<128x128xbf16, #tpu.memory_space<vmem>>, %arg3: memref<2x128xf32, #tpu.memory_space<vmem>>, %arg4: memref<32x128xf32, #tpu.memory_space<vmem>>, %arg5: memref<32x128xf32, #tpu.memory_space<vmem>>) attributes {dimension_semantics = [#tpu.dimension_semantics<parallel>], iteration_bounds = array<i64: 1>, scalar_prefetch = 0 : i64, scratch_operands = 0 : i64, tpu.core_type = #tpu.core_type<tc>, window_params = [{pipeline_mode = #tpu.pipeline_mode<synchronous>, transform_indices = @transform_0, window_bounds = array<i64: 32, 128>}, {transform_indices = @transform_1, window_bounds = array<i64: 128, 128>}, {transform_indices = @transform_2, window_bounds = array<i64: 2, 128>}, {transform_indices = @transform_3, window_bounds = array<i64: 32, 128>}, {transform_indices = @transform_4, window_bounds = array<i64: 32, 128>}]} {
    %c0 = arith.constant 0 : index
    %c0_0 = arith.constant 0 : index
    %0 = vector.load %arg1[%c0, %c0_0] : memref<32x128xbf16, #tpu.memory_space<vmem>>, vector<32x128xbf16>
    %c0_1 = arith.constant 0 : index
    %c0_2 = arith.constant 0 : index
    %1 = vector.load %arg2[%c0_1, %c0_2] : memref<128x128xbf16, #tpu.memory_space<vmem>>, vector<128x128xbf16>
    %cst = arith.constant dense<0.000000e+00> : vector<32x128xf32>
    %2 = tpu.matmul %0, %1, %cst {dimension_numbers = #tpu.dot_dimension_numbers<[1], [0], [0], [1], [0, 0, 1, 1], [], []>} : vector<32x128xbf16>, vector<128x128xbf16>, vector<32x128xf32> -> vector<32x128xf32>
    %cst_3 = arith.constant dense<0.000000e+00> : vector<128xf32>
    %3 = vector.multi_reduction <add>, %2, %cst_3 [0] : vector<32x128xf32> to vector<128xf32>
    %4 = vector.shape_cast %3 : vector<128xf32> to vector<1x128xf32>
    %cst_4 = arith.constant 3.125000e-02 : f32
    %5 = vector.broadcast %cst_4 : f32 to vector<1x128xf32>
    %6 = arith.mulf %4, %5 : vector<1x128xf32>
    %7 = arith.mulf %2, %2 : vector<32x128xf32>
    %cst_5 = arith.constant dense<0.000000e+00> : vector<128xf32>
    %8 = vector.multi_reduction <add>, %7, %cst_5 [0] : vector<32x128xf32> to vector<128xf32>
    %9 = vector.shape_cast %8 : vector<128xf32> to vector<1x128xf32>
    %cst_6 = arith.constant 3.125000e-02 : f32
    %10 = vector.broadcast %cst_6 : f32 to vector<1x128xf32>
    %11 = arith.mulf %9, %10 : vector<1x128xf32>
    %12 = arith.mulf %6, %6 : vector<1x128xf32>
    %13 = arith.subf %11, %12 : vector<1x128xf32>
    %cst_7 = arith.constant 9.99999974E-6 : f32
    %14 = vector.broadcast %cst_7 : f32 to vector<1x128xf32>
    %15 = arith.addf %13, %14 : vector<1x128xf32>
    %16 = math.rsqrt %15 : vector<1x128xf32>
    %c0_8 = arith.constant 0 : index
    %c0_9 = arith.constant 0 : index
    %17 = vector.load %arg3[%c0_8, %c0_9] : memref<2x128xf32, #tpu.memory_space<vmem>>, vector<1x128xf32>
    %18 = arith.mulf %17, %16 : vector<1x128xf32>
    %c1 = arith.constant 1 : index
    %c0_10 = arith.constant 0 : index
    %19 = vector.load %arg3[%c1, %c0_10] : memref<2x128xf32, #tpu.memory_space<vmem>>, vector<1x128xf32>
    %20 = arith.mulf %6, %18 : vector<1x128xf32>
    %21 = arith.subf %19, %20 : vector<1x128xf32>
    %22 = vector.broadcast %18 : vector<1x128xf32> to vector<32x128xf32>
    %23 = arith.mulf %2, %22 : vector<32x128xf32>
    %24 = vector.broadcast %21 : vector<1x128xf32> to vector<32x128xf32>
    %25 = arith.addf %23, %24 : vector<32x128xf32>
    %c0_11 = arith.constant 0 : index
    %c0_12 = arith.constant 0 : index
    %26 = vector.load %arg4[%c0_11, %c0_12] : memref<32x128xf32, #tpu.memory_space<vmem>>, vector<32x128xf32>
    %27 = arith.addf %25, %26 : vector<32x128xf32>
    %c0_13 = arith.constant 0 : index
    %c0_14 = arith.constant 0 : index
    %28 = vector.load %arg5[%c0_13, %c0_14] : memref<32x128xf32, #tpu.memory_space<vmem>>, vector<32x128xf32>
    tpu.vector_store %arg5[%c0_13, %c0_14], %27 {strides = array<i32>} : memref<32x128xf32, #tpu.memory_space<vmem>>, vector<32x128xf32>,
    return
  }
  func.func @transform_0(%arg0: i32) -> (i32, i32) {
    %c0_i32 = arith.constant 0 : i32
    %c0_i32_0 = arith.constant 0 : i32
    %c0_i32_1 = arith.constant 0 : i32
    return %c0_i32, %c0_i32_0 : i32, i32
  }
  func.func @transform_1(%arg0: i32) -> (i32, i32) {
    %c0_i32 = arith.constant 0 : i32
    %c0_i32_0 = arith.constant 0 : i32
    return %c0_i32, %arg0 : i32, i32
  }
  func.func @transform_2(%arg0: i32) -> (i32, i32) {
    %c0_i32 = arith.constant 0 : i32
    %c0_i32_0 = arith.constant 0 : i32
    return %c0_i32, %arg0 : i32, i32
  }
  func.func @transform_3(%arg0: i32) -> (i32, i32) {
    %c0_i32 = arith.constant 0 : i32
    %c0_i32_0 = arith.constant 0 : i32
    return %c0_i32, %arg0 : i32, i32
  }
  func.func @transform_4(%arg0: i32) -> (i32, i32) {
    %c0_i32 = arith.constant 0 : i32
    %c0_i32_0 = arith.constant 0 : i32
    return %c0_i32, %arg0 : i32, i32
  }
}

module attributes {stable_mosaic.version = 11 : i64} {
  func.func @_conv_bn_kernel_1pass(%arg0: i32, %arg1: memref<32x128xbf16, #tpu.memory_space<vmem>>, %arg2: memref<128x128xbf16, #tpu.memory_space<vmem>>, %arg3: memref<2x128xf32, #tpu.memory_space<vmem>>, %arg4: memref<32x128xf32, #tpu.memory_space<vmem>>, %arg5: memref<32x128xf32, #tpu.memory_space<vmem>>) attributes {dimension_semantics = [#tpu.dimension_semantics<parallel>], iteration_bounds = array<i64: 1>, scalar_prefetch = 0 : i64, scratch_operands = 0 : i64, tpu.core_type = #tpu.core_type<tc>, window_params = [{pipeline_mode = #tpu.pipeline_mode<synchronous>, transform_indices = @transform_0, window_bounds = array<i64: 32, 128>}, {transform_indices = @transform_1, window_bounds = array<i64: 128, 128>}, {transform_indices = @transform_2, window_bounds = array<i64: 2, 128>}, {transform_indices = @transform_3, window_bounds = array<i64: 32, 128>}, {transform_indices = @transform_4, window_bounds = array<i64: 32, 128>}]} {
    %c0 = arith.constant 0 : index
    %c0_0 = arith.constant 0 : index
    %0 = vector.load %arg1[%c0, %c0_0] : memref<32x128xbf16, #tpu.memory_space<vmem>>, vector<32x128xbf16>
    %c0_1 = arith.constant 0 : index
    %c0_2 = arith.constant 0 : index
    %1 = vector.load %arg2[%c0_1, %c0_2] : memref<128x128xbf16, #tpu.memory_space<vmem>>, vector<128x128xbf16>
    %cst = arith.constant dense<0.000000e+00> : vector<32x128xf32>
    %2 = tpu.matmul %0, %1, %cst {dimension_numbers = #tpu.dot_dimension_numbers<[1], [0], [0], [1], [0, 0, 1, 1], [], []>} : vector<32x128xbf16>, vector<128x128xbf16>, vector<32x128xf32> -> vector<32x128xf32>
    %cst_3 = arith.constant dense<0.000000e+00> : vector<128xf32>
    %3 = vector.multi_reduction <add>, %2, %cst_3 [0] : vector<32x128xf32> to vector<128xf32>
    %4 = vector.shape_cast %3 : vector<128xf32> to vector<1x128xf32>
    %cst_4 = arith.constant 3.125000e-02 : f32
    %5 = vector.broadcast %cst_4 : f32 to vector<1x128xf32>
    %6 = arith.mulf %4, %5 : vector<1x128xf32>
    %7 = arith.mulf %2, %2 : vector<32x128xf32>
    %cst_5 = arith.constant dense<0.000000e+00> : vector<128xf32>
    %8 = vector.multi_reduction <add>, %7, %cst_5 [0] : vector<32x128xf32> to vector<128xf32>
    %9 = vector.shape_cast %8 : vector<128xf32> to vector<1x128xf32>
    %cst_6 = arith.constant 3.125000e-02 : f32
    %10 = vector.broadcast %cst_6 : f32 to vector<1x128xf32>
    %11 = arith.mulf %9, %10 : vector<1x128xf32>
    %12 = arith.mulf %6, %6 : vector<1x128xf32>
    %13 = arith.subf %11, %12 : vector<1x128xf32>
    %cst_7 = arith.constant 9.99999974E-6 : f32
    %14 = vector.broadcast %cst_7 : f32 to vector<1x128xf32>
    %15 = arith.addf %13, %14 : vector<1x128xf32>
    %16 = math.rsqrt %15 : vector<1x128xf32>
    %c0_8 = arith.constant 0 : index
    %c0_9 = arith.constant 0 : index
    %17 = vector.load %arg3[%c0_8, %c0_9] : memref<2x128xf32, #tpu.memory_space<vmem>>, vector<1x128xf32>
    %18 = arith.mulf %17, %16 : vector<1x128xf32>
    %c1 = arith.constant 1 : index
    %c0_10 = arith.constant 0 : index
    %19 = vector.load %arg3[%c1, %c0_10] : memref<2x128xf32, #tpu.memory_space<vmem>>, vector<1x128xf32>
    %20 = arith.mulf %6, %18 : vector<1x128xf32>
    %21 = arith.subf %19, %20 : vector<1x128xf32>
    %22 = vector.broadcast %18 : vector<1x128xf32> to vector<32x128xf32>
    %23 = arith.mulf %2, %22 : vector<32x128xf32>
    %24 = vector.broadcast %21 : vector<1x128xf32> to vector<32x128xf32>
    %25 = arith.addf %23, %24 : vector<32x128xf32>
    %c0_11 = arith.constant 0 : index
    %c0_12 = arith.constant 0 : index
    %26 = vector.load %arg4[%c0_11, %c0_12] : memref<32x128xf32, #tpu.memory_space<vmem>>, vector<32x128xf32>
    %27 = arith.addf %25, %26 : vector<32x128xf32>
    %c0_13 = arith.constant 0 : index
    %c0_14 = arith.constant 0 : index
    %28 = vector.load %arg5[%c0_13, %c0_14] : memref<32x128xf32, #tpu.memory_space<vmem>>, vector<32x128xf32>
    tpu.vector_store %arg5[%c0_13, %c0_14], %27 {strides = array<i32>} : memref<32x128xf32, #tpu.memory_space<vmem>>, vector<32x128xf32>,
    return
  }
  func.func @transform_0(%arg0: i32) -> (i32, i32) {
    %c0_i32 = arith.constant 0 : i32
    %c0_i32_0 = arith.constant 0 : i32
    %c0_i32_1 = arith.constant 0 : i32
    return %c0_i32, %c0_i32_0 : i32, i32
  }
  func.func @transform_1(%arg0: i32) -> (i32, i32) {
    %c0_i32 = arith.constant 0 : i32
    %c0_i32_0 = arith.constant 0 : i32
    return %c0_i32, %arg0 : i32, i32
  }
  func.func @transform_2(%arg0: i32) -> (i32, i32) {
    %c0_i32 = arith.constant 0 : i32
    %c0_i32_0 = arith.constant 0 : i32
    return %c0_i32, %arg0 : i32, i32
  }
  func.func @transform_3(%arg0: i32) -> (i32, i32) {
    %c0_i32 = arith.constant 0 : i32
    %c0_i32_0 = arith.constant 0 : i32
    return %c0_i32, %arg0 : i32, i32
  }
  func.func @transform_4(%arg0: i32) -> (i32, i32) {
    %c0_i32 = arith.constant 0 : i32
    %c0_i32_0 = arith.constant 0 : i32
    return %c0_i32, %arg0 : i32, i32
  }
}

</mosaic_0001>

<llo_original>
// kernel: forward.6
$region0: #{forward.6}
  #allocation0 [shape = 'u32[]', space=smem, size = 0x4, offset = 0x4, fixed_abs, tag = 'smem constant byte address 0x4 - core index']
  #allocation1 [shape = 'u32[144,128]{1,0:T(1,128)}', space=vmem, size = 0x12000, scoped, tag = 'internal scratch']
  %s0 = inlined_call_operand.vmem [shape: bf16[128,128], index: 0, kind: input, shape index: {}]
  %s1 = inlined_call_operand.vmem [shape: bf16[128,128], index: 1, kind: input, shape index: {}]
  %s2 = inlined_call_operand.vmem [shape: f32[2,128], index: 2, kind: input, shape index: {}]
  %s3 = inlined_call_operand.vmem [shape: f32[128,128], index: 3, kind: output, shape index: {}]
  %s4 = sld [smem:[#allocation0]]
  $region22: #{forward.6} parent=0
    _
  %s6 = ssub.s32 1, %s4
  %s7 = scalar_select 0, %s6, %s4
  // Predicated region
  $region2: #{forward.6} parent=0 // pred_check
    _
  $region3: #{forward.6} parent=0 // pred_check_branch
    %9 = sbr.rel (0) target = $region5
  $region4: #{forward.6} parent=0 // pred_region
    _
  $region5: #{forward.6} parent=0 // pred_fallthru
    _
  // Predicated region
  $region6: #{forward.6} parent=0 // pred_check
    _
  $region7: #{forward.6} parent=0 // pred_check_branch
    %11 = sbr.rel (0) target = $region9
  $region8: #{forward.6} parent=0 // pred_region
    _
  $region9: #{forward.6} parent=0 // pred_fallthru
    _
  // Predicated region
  $region10: #{forward.6} parent=0 // pred_check
    _
  $region11: #{forward.6} parent=0 // pred_check_branch
    %13 = sbr.rel (0) target = $region13
  $region12: #{forward.6} parent=0 // pred_region
    _
  $region13: #{forward.6} parent=0 // pred_fallthru
    _
  %v15 = vld [vmem:[%s0] sm:$0xf]
  %v16 = vld [vmem:[%s0 + $0x4] sm:$0xf]
  %v17 = vld [vmem:[%s0 + $0x8] sm:$0xf]
  %v18 = vld [vmem:[%s0 + $0xc] sm:$0xf]
  %v19 = vld [vmem:[%s0 + $0x10] sm:$0xf]
  %v20 = vld [vmem:[%s0 + $0x14] sm:$0xf]
  %v21 = vld [vmem:[%s0 + $0x18] sm:$0xf]
  %v22 = vld [vmem:[%s0 + $0x1c] sm:$0xf]
  %v23 = vld [vmem:[%s0 + $0x20] sm:$0xf]
  %v24 = vld [vmem:[%s0 + $0x24] sm:$0xf]
  %v25 = vld [vmem:[%s0 + $0x28] sm:$0xf]
  %v26 = vld [vmem:[%s0 + $0x2c] sm:$0xf]
  %v27 = vld [vmem:[%s0 + $0x30] sm:$0xf]
  %v28 = vld [vmem:[%s0 + $0x34] sm:$0xf]
  %v29 = vld [vmem:[%s0 + $0x38] sm:$0xf]
  %v30 = vld [vmem:[%s0 + $0x3c] sm:$0xf]
  %v31 = vld [vmem:[%s1] sm:$0xf]
  %v32 = vld [vmem:[%s1 + $0x4] sm:$0xf]
  %v33 = vld [vmem:[%s1 + $0x8] sm:$0xf]
  %v34 = vld [vmem:[%s1 + $0xc] sm:$0xf]
  %v35 = vld [vmem:[%s1 + $0x10] sm:$0xf]
  %v36 = vld [vmem:[%s1 + $0x14] sm:$0xf]
  %v37 = vld [vmem:[%s1 + $0x18] sm:$0xf]
  %v38 = vld [vmem:[%s1 + $0x1c] sm:$0xf]
  %v39 = vld [vmem:[%s1 + $0x20] sm:$0xf]
  %v40 = vld [vmem:[%s1 + $0x24] sm:$0xf]
  %v41 = vld [vmem:[%s1 + $0x28] sm:$0xf]
  %v42 = vld [vmem:[%s1 + $0x2c] sm:$0xf]
  %v43 = vld [vmem:[%s1 + $0x30] sm:$0xf]
  %v44 = vld [vmem:[%s1 + $0x34] sm:$0xf]
  %v45 = vld [vmem:[%s1 + $0x38] sm:$0xf]
  %v46 = vld [vmem:[%s1 + $0x3c] sm:$0xf]
  %v63 = vunpack.c.l.b16 %v15
  %v64 = vunpack.c.l.b16 %v16
  %v65 = vunpack.c.l.b16 %v17
  %v66 = vunpack.c.l.b16 %v18
  %v67 = vunpack.c.l.b16 %v19
  %v68 = vunpack.c.l.b16 %v20
  %v69 = vunpack.c.l.b16 %v21
  %v70 = vunpack.c.l.b16 %v22
  %v71 = vunpack.c.l.b16 %v23
  %v72 = vunpack.c.l.b16 %v24
  %v73 = vunpack.c.l.b16 %v25
  %v74 = vunpack.c.l.b16 %v26
  %v75 = vunpack.c.l.b16 %v27
  %v76 = vunpack.c.l.b16 %v28
  %v77 = vunpack.c.l.b16 %v29
  %v78 = vunpack.c.l.b16 %v30
  %v79 = vpack.c.b16 %v64, %v63
  %v80 = vpack.c.b16 %v66, %v65
  %v81 = vpack.c.b16 %v68, %v67
  %v82 = vpack.c.b16 %v70, %v69
  %v83 = vpack.c.b16 %v72, %v71
  %v84 = vpack.c.b16 %v74, %v73
  %v85 = vpack.c.b16 %v76, %v75
  %v86 = vpack.c.b16 %v78, %v77
  %v111 = vunpack.c.l.b16 %v31
  %v112 = vunpack.c.l.b16 %v32
  %v113 = vunpack.c.l.b16 %v33
  %v114 = vunpack.c.l.b16 %v34
  %v115 = vunpack.c.l.b16 %v35
  %v116 = vunpack.c.l.b16 %v36
  %v117 = vunpack.c.l.b16 %v37
  %v118 = vunpack.c.l.b16 %v38
  %v119 = vunpack.c.l.b16 %v39
  %v120 = vunpack.c.l.b16 %v40
  %v121 = vunpack.c.l.b16 %v41
  %v122 = vunpack.c.l.b16 %v42
  %v123 = vunpack.c.l.b16 %v43
  %v124 = vunpack.c.l.b16 %v44
  %v125 = vunpack.c.l.b16 %v45
  %v126 = vunpack.c.l.b16 %v46
  %v127 = vpack.c.b16 %v112, %v111
  %v128 = vpack.c.b16 %v114, %v113
  %v129 = vpack.c.b16 %v116, %v115
  %v130 = vpack.c.b16 %v118, %v117
  %v131 = vpack.c.b16 %v120, %v119
  %v132 = vpack.c.b16 %v122, %v121
  %v133 = vpack.c.b16 %v124, %v123
  %v134 = vpack.c.b16 %v126, %v125
  %143 = vmatprep.subr.bf16.mxu0 0
  %144 = vmatpush1.bf16.msra.mxu0 %v127
  %145 = vmatprep.subr.bf16.mxu0 0
  %146 = vmatpush1.bf16.msra.mxu0 %v128
  %147 = vmatprep.subr.bf16.mxu0 0
  %148 = vmatpush1.bf16.msra.mxu0 %v129
  %149 = vmatprep.subr.bf16.mxu0 0
  %150 = vmatpush1.bf16.msra.mxu0 %v130
  %151 = vmatprep.subr.bf16.mxu0 0
  %152 = vmatpush1.bf16.msra.mxu0 %v131
  %153 = vmatprep.subr.bf16.mxu0 0
  %154 = vmatpush1.bf16.msra.mxu0 %v132
  %155 = vmatprep.subr.bf16.mxu0 0
  %156 = vmatpush1.bf16.msra.mxu0 %v133
  %157 = vmatprep.subr.bf16.mxu0 0
  %158 = vmatpush1.bf16.msra.mxu0 %v134
  %159 = vmatprep.subr.bf16.mxu0 0
  %160 = vmatpush1.bf16.msra.mxu0 0
  %161 = vmatprep.subr.bf16.mxu0 0
  %162 = vmatpush1.bf16.msra.mxu0 0
  %163 = vmatprep.subr.bf16.mxu0 0
  %164 = vmatpush1.bf16.msra.mxu0 0
  %165 = vmatprep.subr.bf16.mxu0 0
  %166 = vmatpush1.bf16.msra.mxu0 0
  %167 = vmatprep.subr.bf16.mxu0 0
  %168 = vmatpush1.bf16.msra.mxu0 0
  %169 = vmatprep.subr.bf16.mxu0 0
  %170 = vmatpush1.bf16.msra.mxu0 0
  %171 = vmatprep.subr.bf16.mxu0 0
  %172 = vmatpush1.bf16.msra.mxu0 0
  %173 = vmatprep.subr.bf16.mxu0 0
  %174 = vmatpush1.bf16.msra.mxu0 0
  %175 = vmatprep.mubr.bf16.mxu0 0
  %176 = vmatmul.mubr.bf16.gmra.mrb[0].mxu0 %v79
  %v177 = vpop.f32.mrb[0].mxu0
  %v178 = vadd.f32 0.0, %v177
  %v179 = vpop.f32.mrb[0].mxu0
  %v180 = vpop.f32.mrb[0].mxu0
  %v181 = vadd.f32 0.0, %v180
  %v182 = vpop.f32.mrb[0].mxu0
  %183 = vmatprep.mubr.bf16.mxu0 0
  %184 = vmatmul.mubr.bf16.gmra.mrb[0].mxu0 %v80
  %v185 = vpop.f32.mrb[0].mxu0
  %v186 = vadd.f32 0.0, %v185
  %v187 = vpop.f32.mrb[0].mxu0
  %v188 = vpop.f32.mrb[0].mxu0
  %v189 = vadd.f32 0.0, %v188
  %v190 = vpop.f32.mrb[0].mxu0
  %191 = vmatprep.mubr.bf16.mxu0 0
  %192 = vmatmul.mubr.bf16.gmra.mrb[0].mxu0 %v81
  %v193 = vpop.f32.mrb[0].mxu0
  %v194 = vadd.f32 0.0, %v193
  %v195 = vpop.f32.mrb[0].mxu0
  %v196 = vpop.f32.mrb[0].mxu0
  %v197 = vadd.f32 0.0, %v196
  %v198 = vpop.f32.mrb[0].mxu0
  %199 = vmatprep.mubr.bf16.mxu0 0
  %200 = vmatmul.mubr.bf16.gmra.mrb[0].mxu0 %v82
  %v201 = vpop.f32.mrb[0].mxu0
  %v202 = vadd.f32 0.0, %v201
  %v203 = vpop.f32.mrb[0].mxu0
  %v204 = vpop.f32.mrb[0].mxu0
  %v205 = vadd.f32 0.0, %v204
  %v206 = vpop.f32.mrb[0].mxu0
  %207 = vmatprep.mubr.bf16.mxu0 0
  %208 = vmatmul.mubr.bf16.gmra.mrb[0].mxu0 %v83
  %v209 = vpop.f32.mrb[0].mxu0
  %v210 = vadd.f32 0.0, %v209
  %v211 = vpop.f32.mrb[0].mxu0
  %v212 = vpop.f32.mrb[0].mxu0
  %v213 = vadd.f32 0.0, %v212
  %v214 = vpop.f32.mrb[0].mxu0
  %215 = vmatprep.mubr.bf16.mxu0 0
  %216 = vmatmul.mubr.bf16.gmra.mrb[0].mxu0 %v84
  %v217 = vpop.f32.mrb[0].mxu0
  %v218 = vadd.f32 0.0, %v217
  %v219 = vpop.f32.mrb[0].mxu0
  %v220 = vpop.f32.mrb[0].mxu0
  %v221 = vadd.f32 0.0, %v220
  %v222 = vpop.f32.mrb[0].mxu0
  %223 = vmatprep.mubr.bf16.mxu0 0
  %224 = vmatmul.mubr.bf16.gmra.mrb[0].mxu0 %v85
  %v225 = vpop.f32.mrb[0].mxu0
  %v226 = vadd.f32 0.0, %v225
  %v227 = vpop.f32.mrb[0].mxu0
  %v228 = vpop.f32.mrb[0].mxu0
  %v229 = vadd.f32 0.0, %v228
  %v230 = vpop.f32.mrb[0].mxu0
  %231 = vmatprep.mubr.bf16.mxu0 0
  %232 = vmatmul.mubr.bf16.gmra.mrb[0].mxu0 %v86
  %v233 = vpop.f32.mrb[0].mxu0
  %v234 = vadd.f32 0.0, %v233
  %v235 = vpop.f32.mrb[0].mxu0
  %v236 = vpop.f32.mrb[0].mxu0
  %v237 = vadd.f32 0.0, %v236
  %v238 = vpop.f32.mrb[0].mxu0
  %239 = vdwg.mxu0
  %v240 = vadd.f32 %v178, %v181
  %v241 = vadd.f32 %v240, %v186
  %v242 = vadd.f32 %v241, %v189
  %v243 = vadd.f32 %v242, %v194
  %v244 = vadd.f32 %v243, %v197
  %v245 = vadd.f32 %v244, %v202
  %v246 = vadd.f32 %v245, %v205
  %v247 = vadd.f32 %v246, %v210
  %v248 = vadd.f32 %v247, %v213
  %v249 = vadd.f32 %v248, %v218
  %v250 = vadd.f32 %v249, %v221
  %v251 = vadd.f32 %v250, %v226
  %v252 = vadd.f32 %v251, %v229
  %v253 = vadd.f32 %v252, %v234
  %v254 = vadd.f32 %v253, %v237
  %v255 = vrot.slane %v254, 4
  %v256 = vadd.f32 %v254, %v255
  %v257 = vrot.slane %v256, 2
  %v258 = vadd.f32 %v256, %v257
  %v259 = vrot.slane %v258, 1
  %v260 = vadd.f32 %v258, %v259
  %v261 = vmul.f32 %v260, 0.0078125
  %v262 = vmul.f32 %v178, %v178
  %v263 = vmul.f32 %v181, %v181
  %v264 = vmul.f32 %v186, %v186
  %v265 = vmul.f32 %v189, %v189
  %v266 = vmul.f32 %v194, %v194
  %v267 = vmul.f32 %v197, %v197
  %v268 = vmul.f32 %v202, %v202
  %v269 = vmul.f32 %v205, %v205
  %v270 = vmul.f32 %v210, %v210
  %v271 = vmul.f32 %v213, %v213
  %v272 = vmul.f32 %v218, %v218
  %v273 = vmul.f32 %v221, %v221
  %v274 = vmul.f32 %v226, %v226
  %v275 = vmul.f32 %v229, %v229
  %v276 = vmul.f32 %v234, %v234
  %v277 = vmul.f32 %v237, %v237
  %v278 = vadd.f32 %v262, %v263
  %v279 = vadd.f32 %v278, %v264
  %v280 = vadd.f32 %v279, %v265
  %v281 = vadd.f32 %v280, %v266
  %v282 = vadd.f32 %v281, %v267
  %v283 = vadd.f32 %v282, %v268
  %v284 = vadd.f32 %v283, %v269
  %v285 = vadd.f32 %v284, %v270
  %v286 = vadd.f32 %v285, %v271
  %v287 = vadd.f32 %v286, %v272
  %v288 = vadd.f32 %v287, %v273
  %v289 = vadd.f32 %v288, %v274
  %v290 = vadd.f32 %v289, %v275
  %v291 = vadd.f32 %v290, %v276
  %v292 = vadd.f32 %v291, %v277
  %v293 = vrot.slane %v292, 4
  %v294 = vadd.f32 %v292, %v293
  %v295 = vrot.slane %v294, 2
  %v296 = vadd.f32 %v294, %v295
  %v297 = vrot.slane %v296, 1
  %v298 = vadd.f32 %v296, %v297
  %v299 = vmul.f32 %v298, 0.0078125
  %v300 = vmul.f32 %v261, %v261
  %v301 = vsub.f32 %v299, %v300
  %v302 = vadd.f32 %v301, 1e-05
  %v303 = vrsqrt.pop %v302
  %v304 = vld [vmem:[%s2] sm:$0x1]
  %v305 = vmul.f32 %v304, %v303
  %v306 = vld [vmem:[%s2 + $0x1] sm:$0x1]
  %v307 = vmul.f32 %v261, %v305
  %v308 = vsub.f32 %v306, %v307
  %v309 = vlaneseq
  %v310 = vshrl.u32 %v309, 7
  %v311 = vsub.s32 0, %v310
  %v312 = vrot.slane %v305, %v311
  %v313 = vmul.f32 %v178, %v312
  %v314 = vmul.f32 %v181, %v312
  %v315 = vmul.f32 %v186, %v312
  %v316 = vmul.f32 %v189, %v312
  %v317 = vmul.f32 %v194, %v312
  %v318 = vmul.f32 %v197, %v312
  %v319 = vmul.f32 %v202, %v312
  %v320 = vmul.f32 %v205, %v312
  %v321 = vmul.f32 %v210, %v312
  %v322 = vmul.f32 %v213, %v312
  %v323 = vmul.f32 %v218, %v312
  %v324 = vmul.f32 %v221, %v312
  %v325 = vmul.f32 %v226, %v312
  %v326 = vmul.f32 %v229, %v312
  %v327 = vmul.f32 %v234, %v312
  %v328 = vmul.f32 %v237, %v312
  %v329 = vlaneseq
  %v330 = vshrl.u32 %v329, 7
  %v331 = vsub.s32 0, %v330
  %v332 = vrot.slane %v308, %v331
  %v333 = vadd.f32 %v313, %v332
  %v334 = vadd.f32 %v314, %v332
  %v335 = vadd.f32 %v315, %v332
  %v336 = vadd.f32 %v316, %v332
  %v337 = vadd.f32 %v317, %v332
  %v338 = vadd.f32 %v318, %v332
  %v339 = vadd.f32 %v319, %v332
  %v340 = vadd.f32 %v320, %v332
  %v341 = vadd.f32 %v321, %v332
  %v342 = vadd.f32 %v322, %v332
  %v343 = vadd.f32 %v323, %v332
  %v344 = vadd.f32 %v324, %v332
  %v345 = vadd.f32 %v325, %v332
  %v346 = vadd.f32 %v326, %v332
  %v347 = vadd.f32 %v327, %v332
  %v348 = vadd.f32 %v328, %v332
  %v349 = vmax.f32 %v333, 0.0
  %v350 = vmax.f32 %v334, 0.0
  %v351 = vmax.f32 %v335, 0.0
  %v352 = vmax.f32 %v336, 0.0
  %v353 = vmax.f32 %v337, 0.0
  %v354 = vmax.f32 %v338, 0.0
  %v355 = vmax.f32 %v339, 0.0
  %v356 = vmax.f32 %v340, 0.0
  %v357 = vmax.f32 %v341, 0.0
  %v358 = vmax.f32 %v342, 0.0
  %v359 = vmax.f32 %v343, 0.0
  %v360 = vmax.f32 %v344, 0.0
  %v361 = vmax.f32 %v345, 0.0
  %v362 = vmax.f32 %v346, 0.0
  %v363 = vmax.f32 %v347, 0.0
  %v364 = vmax.f32 %v348, 0.0
  %365 = vst [vmem:[%s3] sm:$0xff] %v349
  %366 = vst [vmem:[%s3 + $0x8] sm:$0xff] %v350
  %367 = vst [vmem:[%s3 + $0x10] sm:$0xff] %v351
  %368 = vst [vmem:[%s3 + $0x18] sm:$0xff] %v352
  %369 = vst [vmem:[%s3 + $0x20] sm:$0xff] %v353
  %370 = vst [vmem:[%s3 + $0x28] sm:$0xff] %v354
  %371 = vst [vmem:[%s3 + $0x30] sm:$0xff] %v355
  %372 = vst [vmem:[%s3 + $0x38] sm:$0xff] %v356
  %373 = vst [vmem:[%s3 + $0x40] sm:$0xff] %v357
  %374 = vst [vmem:[%s3 + $0x48] sm:$0xff] %v358
  %375 = vst [vmem:[%s3 + $0x50] sm:$0xff] %v359
  %376 = vst [vmem:[%s3 + $0x58] sm:$0xff] %v360
  %377 = vst [vmem:[%s3 + $0x60] sm:$0xff] %v361
  %378 = vst [vmem:[%s3 + $0x68] sm:$0xff] %v362
  %379 = vst [vmem:[%s3 + $0x70] sm:$0xff] %v363
  %380 = vst [vmem:[%s3 + $0x78] sm:$0xff] %v364
  // Predicated region
  $region14: #{forward.6} parent=0 // pred_check
    _
  $region15: #{forward.6} parent=0 // pred_check_branch
    %382 = sbr.rel (0) target = $region17
  $region16: #{forward.6} parent=0 // pred_region
    _
  $region17: #{forward.6} parent=0 // pred_fallthru
    _
  // Predicated region
  $region18: #{forward.6} parent=0 // pred_check
    _
  $region19: #{forward.6} parent=0 // pred_check_branch
    %384 = sbr.rel (0) target = $region21
  $region20: #{forward.6} parent=0 // pred_region
    _
  $region21: #{forward.6} parent=0 // pred_fallthru
    _

// kernel: forward.7
$region0: #{forward.7}
  #allocation0 [shape = 'u32[]', space=smem, size = 0x4, offset = 0x4, fixed_abs, tag = 'smem constant byte address 0x4 - core index']
  #allocation1 [shape = 'u32[144,128]{1,0:T(1,128)}', space=vmem, size = 0x12000, scoped, tag = 'internal scratch']
  %s0 = inlined_call_operand.vmem [shape: bf16[32,512], index: 0, kind: input, shape index: {}]
  %s1 = inlined_call_operand.vmem [shape: bf16[512,128], index: 1, kind: input, shape index: {}]
  %s2 = inlined_call_operand.vmem [shape: f32[2,128], index: 2, kind: input, shape index: {}]
  %s3 = inlined_call_operand.vmem [shape: f32[32,128], index: 3, kind: output, shape index: {}]
  %s4 = sld [smem:[#allocation0]]
  $region22: #{forward.7} parent=0
    _
  %s6 = ssub.s32 1, %s4
  %s7 = scalar_select 0, %s6, %s4
  // Predicated region
  $region2: #{forward.7} parent=0 // pred_check
    _
  $region3: #{forward.7} parent=0 // pred_check_branch
    %9 = sbr.rel (0) target = $region5
  $region4: #{forward.7} parent=0 // pred_region
    _
  $region5: #{forward.7} parent=0 // pred_fallthru
    _
  // Predicated region
  $region6: #{forward.7} parent=0 // pred_check
    _
  $region7: #{forward.7} parent=0 // pred_check_branch
    %11 = sbr.rel (0) target = $region9
  $region8: #{forward.7} parent=0 // pred_region
    _
  $region9: #{forward.7} parent=0 // pred_fallthru
    _
  // Predicated region
  $region10: #{forward.7} parent=0 // pred_check
    _
  $region11: #{forward.7} parent=0 // pred_check_branch
    %13 = sbr.rel (0) target = $region13
  $region12: #{forward.7} parent=0 // pred_region
    _
  $region13: #{forward.7} parent=0 // pred_fallthru
    _
  %v15 = vld [vmem:[%s0] sm:$0xff]
  %v16 = vld [vmem:[%s0 + $0x8] sm:$0xff]
  %v17 = vld [vmem:[%s0 + $0x10] sm:$0xff]
  %v18 = vld [vmem:[%s0 + $0x18] sm:$0xff]
  %v19 = vld [vmem:[%s0 + $0x20] sm:$0xff]
  %v20 = vld [vmem:[%s0 + $0x28] sm:$0xff]
  %v21 = vld [vmem:[%s0 + $0x30] sm:$0xff]
  %v22 = vld [vmem:[%s0 + $0x38] sm:$0xff]
  %v23 = vld [vmem:[%s1] sm:$0xf]
  %v24 = vld [vmem:[%s1 + $0x4] sm:$0xf]
  %v25 = vld [vmem:[%s1 + $0x8] sm:$0xf]
  %v26 = vld [vmem:[%s1 + $0xc] sm:$0xf]
  %v27 = vld [vmem:[%s1 + $0x10] sm:$0xf]
  %v28 = vld [vmem:[%s1 + $0x14] sm:$0xf]
  %v29 = vld [vmem:[%s1 + $0x18] sm:$0xf]
  %v30 = vld [vmem:[%s1 + $0x1c] sm:$0xf]
  %v31 = vld [vmem:[%s1 + $0x20] sm:$0xf]
  %v32 = vld [vmem:[%s1 + $0x24] sm:$0xf]
  %v33 = vld [vmem:[%s1 + $0x28] sm:$0xf]
  %v34 = vld [vmem:[%s1 + $0x2c] sm:$0xf]
  %v35 = vld [vmem:[%s1 + $0x30] sm:$0xf]
  %v36 = vld [vmem:[%s1 + $0x34] sm:$0xf]
  %v37 = vld [vmem:[%s1 + $0x38] sm:$0xf]
  %v38 = vld [vmem:[%s1 + $0x3c] sm:$0xf]
  %v39 = vld [vmem:[%s1 + $0x40] sm:$0xf]
  %v40 = vld [vmem:[%s1 + $0x44] sm:$0xf]
  %v41 = vld [vmem:[%s1 + $0x48] sm:$0xf]
  %v42 = vld [vmem:[%s1 + $0x4c] sm:$0xf]
  %v43 = vld [vmem:[%s1 + $0x50] sm:$0xf]
  %v44 = vld [vmem:[%s1 + $0x54] sm:$0xf]
  %v45 = vld [vmem:[%s1 + $0x58] sm:$0xf]
  %v46 = vld [vmem:[%s1 + $0x5c] sm:$0xf]
  %v47 = vld [vmem:[%s1 + $0x60] sm:$0xf]
  %v48 = vld [vmem:[%s1 + $0x64] sm:$0xf]
  %v49 = vld [vmem:[%s1 + $0x68] sm:$0xf]
  %v50 = vld [vmem:[%s1 + $0x6c] sm:$0xf]
  %v51 = vld [vmem:[%s1 + $0x70] sm:$0xf]
  %v52 = vld [vmem:[%s1 + $0x74] sm:$0xf]
  %v53 = vld [vmem:[%s1 + $0x78] sm:$0xf]
  %v54 = vld [vmem:[%s1 + $0x7c] sm:$0xf]
  %v55 = vld [vmem:[%s1 + $0x80] sm:$0xf]
  %v56 = vld [vmem:[%s1 + $0x84] sm:$0xf]
  %v57 = vld [vmem:[%s1 + $0x88] sm:$0xf]
  %v58 = vld [vmem:[%s1 + $0x8c] sm:$0xf]
  %v59 = vld [vmem:[%s1 + $0x90] sm:$0xf]
  %v60 = vld [vmem:[%s1 + $0x94] sm:$0xf]
  %v61 = vld [vmem:[%s1 + $0x98] sm:$0xf]
  %v62 = vld [vmem:[%s1 + $0x9c] sm:$0xf]
  %v63 = vld [vmem:[%s1 + $0xa0] sm:$0xf]
  %v64 = vld [vmem:[%s1 + $0xa4] sm:$0xf]
  %v65 = vld [vmem:[%s1 + $0xa8] sm:$0xf]
  %v66 = vld [vmem:[%s1 + $0xac] sm:$0xf]
  %v67 = vld [vmem:[%s1 + $0xb0] sm:$0xf]
  %v68 = vld [vmem:[%s1 + $0xb4] sm:$0xf]
  %v69 = vld [vmem:[%s1 + $0xb8] sm:$0xf]
  %v70 = vld [vmem:[%s1 + $0xbc] sm:$0xf]
  %v71 = vld [vmem:[%s1 + $0xc0] sm:$0xf]
  %v72 = vld [vmem:[%s1 + $0xc4] sm:$0xf]
  %v73 = vld [vmem:[%s1 + $0xc8] sm:$0xf]
  %v74 = vld [vmem:[%s1 + $0xcc] sm:$0xf]
  %v75 = vld [vmem:[%s1 + $0xd0] sm:$0xf]
  %v76 = vld [vmem:[%s1 + $0xd4] sm:$0xf]
  %v77 = vld [vmem:[%s1 + $0xd8] sm:$0xf]
  %v78 = vld [vmem:[%s1 + $0xdc] sm:$0xf]
  %v79 = vld [vmem:[%s1 + $0xe0] sm:$0xf]
  %v80 = vld [vmem:[%s1 + $0xe4] sm:$0xf]
  %v81 = vld [vmem:[%s1 + $0xe8] sm:$0xf]
  %v82 = vld [vmem:[%s1 + $0xec] sm:$0xf]
  %v83 = vld [vmem:[%s1 + $0xf0] sm:$0xf]
  %v84 = vld [vmem:[%s1 + $0xf4] sm:$0xf]
  %v85 = vld [vmem:[%s1 + $0xf8] sm:$0xf]
  %v86 = vld [vmem:[%s1 + $0xfc] sm:$0xf]
  %v95 = vunpack.c.l.b16 %v15
  %v96 = vunpack.c.h.b16 %v15
  %v97 = vunpack.c.l.b16 %v16
  %v98 = vunpack.c.h.b16 %v16
  %v99 = vunpack.c.l.b16 %v17
  %v100 = vunpack.c.h.b16 %v17
  %v101 = vunpack.c.l.b16 %v18
  %v102 = vunpack.c.h.b16 %v18
  %v103 = vunpack.c.l.b16 %v19
  %v104 = vunpack.c.h.b16 %v19
  %v105 = vunpack.c.l.b16 %v20
  %v106 = vunpack.c.h.b16 %v20
  %v107 = vunpack.c.l.b16 %v21
  %v108 = vunpack.c.h.b16 %v21
  %v109 = vunpack.c.l.b16 %v22
  %v110 = vunpack.c.h.b16 %v22
  %v111 = vpack.c.b16 %v99, %v95
  %v112 = vpack.c.b16 %v100, %v96
  %v113 = vpack.c.b16 %v101, %v97
  %v114 = vpack.c.b16 %v102, %v98
  %v115 = vpack.c.b16 %v107, %v103
  %v116 = vpack.c.b16 %v108, %v104
  %v117 = vpack.c.b16 %v109, %v105
  %v118 = vpack.c.b16 %v110, %v106
  %v191 = vunpack.c.l.b16 %v23
  %v192 = vunpack.c.l.b16 %v24
  %v193 = vunpack.c.l.b16 %v25
  %v194 = vunpack.c.l.b16 %v26
  %v195 = vunpack.c.l.b16 %v27
  %v196 = vunpack.c.l.b16 %v28
  %v197 = vunpack.c.l.b16 %v29
  %v198 = vunpack.c.l.b16 %v30
  %v199 = vunpack.c.l.b16 %v31
  %v200 = vunpack.c.l.b16 %v32
  %v201 = vunpack.c.l.b16 %v33
  %v202 = vunpack.c.l.b16 %v34
  %v203 = vunpack.c.l.b16 %v35
  %v204 = vunpack.c.l.b16 %v36
  %v205 = vunpack.c.l.b16 %v37
  %v206 = vunpack.c.l.b16 %v38
  %v207 = vunpack.c.l.b16 %v39
  %v208 = vunpack.c.l.b16 %v40
  %v209 = vunpack.c.l.b16 %v41
  %v210 = vunpack.c.l.b16 %v42
  %v211 = vunpack.c.l.b16 %v43
  %v212 = vunpack.c.l.b16 %v44
  %v213 = vunpack.c.l.b16 %v45
  %v214 = vunpack.c.l.b16 %v46
  %v215 = vunpack.c.l.b16 %v47
  %v216 = vunpack.c.l.b16 %v48
  %v217 = vunpack.c.l.b16 %v49
  %v218 = vunpack.c.l.b16 %v50
  %v219 = vunpack.c.l.b16 %v51
  %v220 = vunpack.c.l.b16 %v52
  %v221 = vunpack.c.l.b16 %v53
  %v222 = vunpack.c.l.b16 %v54
  %v223 = vunpack.c.l.b16 %v55
  %v224 = vunpack.c.l.b16 %v56
  %v225 = vunpack.c.l.b16 %v57
  %v226 = vunpack.c.l.b16 %v58
  %v227 = vunpack.c.l.b16 %v59
  %v228 = vunpack.c.l.b16 %v60
  %v229 = vunpack.c.l.b16 %v61
  %v230 = vunpack.c.l.b16 %v62
  %v231 = vunpack.c.l.b16 %v63
  %v232 = vunpack.c.l.b16 %v64
  %v233 = vunpack.c.l.b16 %v65
  %v234 = vunpack.c.l.b16 %v66
  %v235 = vunpack.c.l.b16 %v67
  %v236 = vunpack.c.l.b16 %v68
  %v237 = vunpack.c.l.b16 %v69
  %v238 = vunpack.c.l.b16 %v70
  %v239 = vunpack.c.l.b16 %v71
  %v240 = vunpack.c.l.b16 %v72
  %v241 = vunpack.c.l.b16 %v73
  %v242 = vunpack.c.l.b16 %v74
  %v243 = vunpack.c.l.b16 %v75
  %v244 = vunpack.c.l.b16 %v76
  %v245 = vunpack.c.l.b16 %v77
  %v246 = vunpack.c.l.b16 %v78
  %v247 = vunpack.c.l.b16 %v79
  %v248 = vunpack.c.l.b16 %v80
  %v249 = vunpack.c.l.b16 %v81
  %v250 = vunpack.c.l.b16 %v82
  %v251 = vunpack.c.l.b16 %v83
  %v252 = vunpack.c.l.b16 %v84
  %v253 = vunpack.c.l.b16 %v85
  %v254 = vunpack.c.l.b16 %v86
  %v255 = vpack.c.b16 %v192, %v191
  %v256 = vpack.c.b16 %v194, %v193
  %v257 = vpack.c.b16 %v196, %v195
  %v258 = vpack.c.b16 %v198, %v197
  %v259 = vpack.c.b16 %v200, %v199
  %v260 = vpack.c.b16 %v202, %v201
  %v261 = vpack.c.b16 %v204, %v203
  %v262 = vpack.c.b16 %v206, %v205
  %v263 = vpack.c.b16 %v208, %v207
  %v264 = vpack.c.b16 %v210, %v209
  %v265 = vpack.c.b16 %v212, %v211
  %v266 = vpack.c.b16 %v214, %v213
  %v267 = vpack.c.b16 %v216, %v215
  %v268 = vpack.c.b16 %v218, %v217
  %v269 = vpack.c.b16 %v220, %v219
  %v270 = vpack.c.b16 %v222, %v221
  %v271 = vpack.c.b16 %v224, %v223
  %v272 = vpack.c.b16 %v226, %v225
  %v273 = vpack.c.b16 %v228, %v227
  %v274 = vpack.c.b16 %v230, %v229
  %v275 = vpack.c.b16 %v232, %v231
  %v276 = vpack.c.b16 %v234, %v233
  %v277 = vpack.c.b16 %v236, %v235
  %v278 = vpack.c.b16 %v238, %v237
  %v279 = vpack.c.b16 %v240, %v239
  %v280 = vpack.c.b16 %v242, %v241
  %v281 = vpack.c.b16 %v244, %v243
  %v282 = vpack.c.b16 %v246, %v245
  %v283 = vpack.c.b16 %v248, %v247
  %v284 = vpack.c.b16 %v250, %v249
  %v285 = vpack.c.b16 %v252, %v251
  %v286 = vpack.c.b16 %v254, %v253
  %319 = vmatprep.subr.bf16.mxu0 0
  %320 = vmatpush1.bf16.msra.mxu0 %v255
  %321 = vmatprep.subr.bf16.mxu0 0
  %322 = vmatpush1.bf16.msra.mxu0 %v256
  %323 = vmatprep.subr.bf16.mxu0 0
  %324 = vmatpush1.bf16.msra.mxu0 %v257
  %325 = vmatprep.subr.bf16.mxu0 0
  %326 = vmatpush1.bf16.msra.mxu0 %v258
  %327 = vmatprep.subr.bf16.mxu0 0
  %328 = vmatpush1.bf16.msra.mxu0 %v259
  %329 = vmatprep.subr.bf16.mxu0 0
  %330 = vmatpush1.bf16.msra.mxu0 %v260
  %331 = vmatprep.subr.bf16.mxu0 0
  %332 = vmatpush1.bf16.msra.mxu0 %v261
  %333 = vmatprep.subr.bf16.mxu0 0
  %334 = vmatpush1.bf16.msra.mxu0 %v262
  %335 = vmatprep.subr.bf16.mxu0 0
  %336 = vmatpush1.bf16.msra.mxu0 %v263
  %337 = vmatprep.subr.bf16.mxu0 0
  %338 = vmatpush1.bf16.msra.mxu0 %v264
  %339 = vmatprep.subr.bf16.mxu0 0
  %340 = vmatpush1.bf16.msra.mxu0 %v265
  %341 = vmatprep.subr.bf16.mxu0 0
  %342 = vmatpush1.bf16.msra.mxu0 %v266
  %343 = vmatprep.subr.bf16.mxu0 0
  %344 = vmatpush1.bf16.msra.mxu0 %v267
  %345 = vmatprep.subr.bf16.mxu0 0
  %346 = vmatpush1.bf16.msra.mxu0 %v268
  %347 = vmatprep.subr.bf16.mxu0 0
  %348 = vmatpush1.bf16.msra.mxu0 %v269
  %349 = vmatprep.subr.bf16.mxu0 0
  %350 = vmatpush1.bf16.msra.mxu0 %v270
  %351 = vmatprep.mubr.bf16.mxu0 %v112
  %352 = vmatmul.mubr.bf16.gmra.mrb[0].mxu0 %v111
  %v353 = vpop.f32.mrb[0].mxu0
  %v354 = vadd.f32 0.0, %v353
  %v355 = vpop.f32.mrb[0].mxu0
  %v356 = vpop.f32.mrb[0].mxu0
  %v357 = vadd.f32 0.0, %v356
  %v358 = vpop.f32.mrb[0].mxu0
  %359 = vmatprep.mubr.bf16.mxu0 %v116
  %360 = vmatmul.mubr.bf16.gmra.mrb[0].mxu0 %v115
  %v361 = vpop.f32.mrb[0].mxu0
  %v362 = vadd.f32 0.0, %v361
  %v363 = vpop.f32.mrb[0].mxu0
  %v364 = vpop.f32.mrb[0].mxu0
  %v365 = vadd.f32 0.0, %v364
  %v366 = vpop.f32.mrb[0].mxu0
  %367 = vdwg.mxu0
  %368 = vmatprep.subr.bf16.mxu0 0
  %369 = vmatpush1.bf16.msra.mxu0 %v271
  %370 = vmatprep.subr.bf16.mxu0 0
  %371 = vmatpush1.bf16.msra.mxu0 %v272
  %372 = vmatprep.subr.bf16.mxu0 0
  %373 = vmatpush1.bf16.msra.mxu0 %v273
  %374 = vmatprep.subr.bf16.mxu0 0
  %375 = vmatpush1.bf16.msra.mxu0 %v274
  %376 = vmatprep.subr.bf16.mxu0 0
  %377 = vmatpush1.bf16.msra.mxu0 %v275
  %378 = vmatprep.subr.bf16.mxu0 0
  %379 = vmatpush1.bf16.msra.mxu0 %v276
  %380 = vmatprep.subr.bf16.mxu0 0
  %381 = vmatpush1.bf16.msra.mxu0 %v277
  %382 = vmatprep.subr.bf16.mxu0 0
  %383 = vmatpush1.bf16.msra.mxu0 %v278
  %384 = vmatprep.subr.bf16.mxu0 0
  %385 = vmatpush1.bf16.msra.mxu0 %v279
  %386 = vmatprep.subr.bf16.mxu0 0
  %387 = vmatpush1.bf16.msra.mxu0 %v280
  %388 = vmatprep.subr.bf16.mxu0 0
  %389 = vmatpush1.bf16.msra.mxu0 %v281
  %390 = vmatprep.subr.bf16.mxu0 0
  %391 = vmatpush1.bf16.msra.mxu0 %v282
  %392 = vmatprep.subr.bf16.mxu0 0
  %393 = vmatpush1.bf16.msra.mxu0 %v283
  %394 = vmatprep.subr.bf16.mxu0 0
  %395 = vmatpush1.bf16.msra.mxu0 %v284
  %396 = vmatprep.subr.bf16.mxu0 0
  %397 = vmatpush1.bf16.msra.mxu0 %v285
  %398 = vmatprep.subr.bf16.mxu0 0
  %399 = vmatpush1.bf16.msra.mxu0 %v286
  %400 = vmatprep.mubr.bf16.mxu0 %v114
  %401 = vmatmul.mubr.bf16.gmra.mrb[0].mxu0 %v113
  %v402 = vpop.f32.mrb[0].mxu0
  %v403 = vadd.f32 %v354, %v402
  %v404 = vpop.f32.mrb[0].mxu0
  %v405 = vpop.f32.mrb[0].mxu0
  %v406 = vadd.f32 %v357, %v405
  %v407 = vpop.f32.mrb[0].mxu0
  %408 = vmatprep.mubr.bf16.mxu0 %v118
  %409 = vmatmul.mubr.bf16.gmra.mrb[0].mxu0 %v117
  %v410 = vpop.f32.mrb[0].mxu0
  %v411 = vadd.f32 %v362, %v410
  %v412 = vpop.f32.mrb[0].mxu0
  %v413 = vpop.f32.mrb[0].mxu0
  %v414 = vadd.f32 %v365, %v413
  %v415 = vpop.f32.mrb[0].mxu0
  %416 = vdwg.mxu0
  %v417 = vadd.f32 %v403, %v406
  %v418 = vadd.f32 %v417, %v411
  %v419 = vadd.f32 %v418, %v414
  %v420 = vrot.slane %v419, 4
  %v421 = vadd.f32 %v419, %v420
  %v422 = vrot.slane %v421, 2
  %v423 = vadd.f32 %v421, %v422
  %v424 = vrot.slane %v423, 1
  %v425 = vadd.f32 %v423, %v424
  %v426 = vmul.f32 %v425, 0.03125
  %v427 = vmul.f32 %v403, %v403
  %v428 = vmul.f32 %v406, %v406
  %v429 = vmul.f32 %v411, %v411
  %v430 = vmul.f32 %v414, %v414
  %v431 = vadd.f32 %v427, %v428
  %v432 = vadd.f32 %v431, %v429
  %v433 = vadd.f32 %v432, %v430
  %v434 = vrot.slane %v433, 4
  %v435 = vadd.f32 %v433, %v434
  %v436 = vrot.slane %v435, 2
  %v437 = vadd.f32 %v435, %v436
  %v438 = vrot.slane %v437, 1
  %v439 = vadd.f32 %v437, %v438
  %v440 = vmul.f32 %v439, 0.03125
  %v441 = vmul.f32 %v426, %v426
  %v442 = vsub.f32 %v440, %v441
  %v443 = vadd.f32 %v442, 1e-05
  %v444 = vrsqrt.pop %v443
  %v445 = vld [vmem:[%s2] sm:$0x1]
  %v446 = vmul.f32 %v445, %v444
  %v447 = vld [vmem:[%s2 + $0x1] sm:$0x1]
  %v448 = vmul.f32 %v426, %v446
  %v449 = vsub.f32 %v447, %v448
  %v450 = vlaneseq
  %v451 = vshrl.u32 %v450, 7
  %v452 = vsub.s32 0, %v451
  %v453 = vrot.slane %v446, %v452
  %v454 = vmul.f32 %v403, %v453
  %v455 = vmul.f32 %v406, %v453
  %v456 = vmul.f32 %v411, %v453
  %v457 = vmul.f32 %v414, %v453
  %v458 = vlaneseq
  %v459 = vshrl.u32 %v458, 7
  %v460 = vsub.s32 0, %v459
  %v461 = vrot.slane %v449, %v460
  %v462 = vadd.f32 %v454, %v461
  %v463 = vadd.f32 %v455, %v461
  %v464 = vadd.f32 %v456, %v461
  %v465 = vadd.f32 %v457, %v461
  %v466 = vmax.f32 %v462, 0.0
  %v467 = vmax.f32 %v463, 0.0
  %v468 = vmax.f32 %v464, 0.0
  %v469 = vmax.f32 %v465, 0.0
  %470 = vst [vmem:[%s3] sm:$0xff] %v466
  %471 = vst [vmem:[%s3 + $0x8] sm:$0xff] %v467
  %472 = vst [vmem:[%s3 + $0x10] sm:$0xff] %v468
  %473 = vst [vmem:[%s3 + $0x18] sm:$0xff] %v469
  // Predicated region
  $region14: #{forward.7} parent=0 // pred_check
    _
  $region15: #{forward.7} parent=0 // pred_check_branch
    %475 = sbr.rel (0) target = $region17
  $region16: #{forward.7} parent=0 // pred_region
    _
  $region17: #{forward.7} parent=0 // pred_fallthru
    _
  // Predicated region
  $region18: #{forward.7} parent=0 // pred_check
    _
  $region19: #{forward.7} parent=0 // pred_check_branch
    %477 = sbr.rel (0) target = $region21
  $region20: #{forward.7} parent=0 // pred_region
    _
  $region21: #{forward.7} parent=0 // pred_fallthru
    _

// kernel: forward.9
$region0: #{forward.9}
  #allocation0 [shape = 'u32[]', space=smem, size = 0x4, offset = 0x4, fixed_abs, tag = 'smem constant byte address 0x4 - core index']
  #allocation1 [shape = 'u32[144,128]{1,0:T(1,128)}', space=vmem, size = 0x12000, scoped, tag = 'internal scratch']
  %s0 = inlined_call_operand.vmem [shape: bf16[32,128], index: 0, kind: input, shape index: {}]
  %s1 = inlined_call_operand.vmem [shape: bf16[128,128], index: 1, kind: input, shape index: {}]
  %s2 = inlined_call_operand.vmem [shape: f32[2,128], index: 2, kind: input, shape index: {}]
  %s3 = inlined_call_operand.vmem [shape: f32[32,128], index: 3, kind: input, shape index: {}]
  %s4 = inlined_call_operand.vmem [shape: f32[32,128], index: 4, kind: output, shape index: {}]
  %s5 = sld [smem:[#allocation0]]
  $region26: #{forward.9} parent=0
    _
  %s7 = ssub.s32 1, %s5
  %s8 = scalar_select 0, %s7, %s5
  // Predicated region
  $region2: #{forward.9} parent=0 // pred_check
    _
  $region3: #{forward.9} parent=0 // pred_check_branch
    %10 = sbr.rel (0) target = $region5
  $region4: #{forward.9} parent=0 // pred_region
    _
  $region5: #{forward.9} parent=0 // pred_fallthru
    _
  // Predicated region
  $region6: #{forward.9} parent=0 // pred_check
    _
  $region7: #{forward.9} parent=0 // pred_check_branch
    %12 = sbr.rel (0) target = $region9
  $region8: #{forward.9} parent=0 // pred_region
    _
  $region9: #{forward.9} parent=0 // pred_fallthru
    _
  // Predicated region
  $region10: #{forward.9} parent=0 // pred_check
    _
  $region11: #{forward.9} parent=0 // pred_check_branch
    %14 = sbr.rel (0) target = $region13
  $region12: #{forward.9} parent=0 // pred_region
    _
  $region13: #{forward.9} parent=0 // pred_fallthru
    _
  // Predicated region
  $region14: #{forward.9} parent=0 // pred_check
    _
  $region15: #{forward.9} parent=0 // pred_check_branch
    %16 = sbr.rel (0) target = $region17
  $region16: #{forward.9} parent=0 // pred_region
    _
  $region17: #{forward.9} parent=0 // pred_fallthru
    _
  %v18 = vld [vmem:[%s0] sm:$0xf]
  %v19 = vld [vmem:[%s0 + $0x4] sm:$0xf]
  %v20 = vld [vmem:[%s0 + $0x8] sm:$0xf]
  %v21 = vld [vmem:[%s0 + $0xc] sm:$0xf]
  %v22 = vld [vmem:[%s1] sm:$0xf]
  %v23 = vld [vmem:[%s1 + $0x4] sm:$0xf]
  %v24 = vld [vmem:[%s1 + $0x8] sm:$0xf]
  %v25 = vld [vmem:[%s1 + $0xc] sm:$0xf]
  %v26 = vld [vmem:[%s1 + $0x10] sm:$0xf]
  %v27 = vld [vmem:[%s1 + $0x14] sm:$0xf]
  %v28 = vld [vmem:[%s1 + $0x18] sm:$0xf]
  %v29 = vld [vmem:[%s1 + $0x1c] sm:$0xf]
  %v30 = vld [vmem:[%s1 + $0x20] sm:$0xf]
  %v31 = vld [vmem:[%s1 + $0x24] sm:$0xf]
  %v32 = vld [vmem:[%s1 + $0x28] sm:$0xf]
  %v33 = vld [vmem:[%s1 + $0x2c] sm:$0xf]
  %v34 = vld [vmem:[%s1 + $0x30] sm:$0xf]
  %v35 = vld [vmem:[%s1 + $0x34] sm:$0xf]
  %v36 = vld [vmem:[%s1 + $0x38] sm:$0xf]
  %v37 = vld [vmem:[%s1 + $0x3c] sm:$0xf]
  %v42 = vunpack.c.l.b16 %v18
  %v43 = vunpack.c.l.b16 %v19
  %v44 = vunpack.c.l.b16 %v20
  %v45 = vunpack.c.l.b16 %v21
  %v46 = vpack.c.b16 %v43, %v42
  %v47 = vpack.c.b16 %v45, %v44
  %v66 = vunpack.c.l.b16 %v22
  %v67 = vunpack.c.l.b16 %v23
  %v68 = vunpack.c.l.b16 %v24
  %v69 = vunpack.c.l.b16 %v25
  %v70 = vunpack.c.l.b16 %v26
  %v71 = vunpack.c.l.b16 %v27
  %v72 = vunpack.c.l.b16 %v28
  %v73 = vunpack.c.l.b16 %v29
  %v74 = vunpack.c.l.b16 %v30
  %v75 = vunpack.c.l.b16 %v31
  %v76 = vunpack.c.l.b16 %v32
  %v77 = vunpack.c.l.b16 %v33
  %v78 = vunpack.c.l.b16 %v34
  %v79 = vunpack.c.l.b16 %v35
  %v80 = vunpack.c.l.b16 %v36
  %v81 = vunpack.c.l.b16 %v37
  %v82 = vpack.c.b16 %v67, %v66
  %v83 = vpack.c.b16 %v69, %v68
  %v84 = vpack.c.b16 %v71, %v70
  %v85 = vpack.c.b16 %v73, %v72
  %v86 = vpack.c.b16 %v75, %v74
  %v87 = vpack.c.b16 %v77, %v76
  %v88 = vpack.c.b16 %v79, %v78
  %v89 = vpack.c.b16 %v81, %v80
  %98 = vmatprep.subr.bf16.mxu0 0
  %99 = vmatpush1.bf16.msra.mxu0 %v82
  %100 = vmatprep.subr.bf16.mxu0 0
  %101 = vmatpush1.bf16.msra.mxu0 %v83
  %102 = vmatprep.subr.bf16.mxu0 0
  %103 = vmatpush1.bf16.msra.mxu0 %v84
  %104 = vmatprep.subr.bf16.mxu0 0
  %105 = vmatpush1.bf16.msra.mxu0 %v85
  %106 = vmatprep.subr.bf16.mxu0 0
  %107 = vmatpush1.bf16.msra.mxu0 %v86
  %108 = vmatprep.subr.bf16.mxu0 0
  %109 = vmatpush1.bf16.msra.mxu0 %v87
  %110 = vmatprep.subr.bf16.mxu0 0
  %111 = vmatpush1.bf16.msra.mxu0 %v88
  %112 = vmatprep.subr.bf16.mxu0 0
  %113 = vmatpush1.bf16.msra.mxu0 %v89
  %114 = vmatprep.subr.bf16.mxu0 0
  %115 = vmatpush1.bf16.msra.mxu0 0
  %116 = vmatprep.subr.bf16.mxu0 0
  %117 = vmatpush1.bf16.msra.mxu0 0
  %118 = vmatprep.subr.bf16.mxu0 0
  %119 = vmatpush1.bf16.msra.mxu0 0
  %120 = vmatprep.subr.bf16.mxu0 0
  %121 = vmatpush1.bf16.msra.mxu0 0
  %122 = vmatprep.subr.bf16.mxu0 0
  %123 = vmatpush1.bf16.msra.mxu0 0
  %124 = vmatprep.subr.bf16.mxu0 0
  %125 = vmatpush1.bf16.msra.mxu0 0
  %126 = vmatprep.subr.bf16.mxu0 0
  %127 = vmatpush1.bf16.msra.mxu0 0
  %128 = vmatprep.subr.bf16.mxu0 0
  %129 = vmatpush1.bf16.msra.mxu0 0
  %130 = vmatprep.mubr.bf16.mxu0 0
  %131 = vmatmul.mubr.bf16.gmra.mrb[0].mxu0 %v46
  %v132 = vpop.f32.mrb[0].mxu0
  %v133 = vadd.f32 0.0, %v132
  %v134 = vpop.f32.mrb[0].mxu0
  %v135 = vpop.f32.mrb[0].mxu0
  %v136 = vadd.f32 0.0, %v135
  %v137 = vpop.f32.mrb[0].mxu0
  %138 = vmatprep.mubr.bf16.mxu0 0
  %139 = vmatmul.mubr.bf16.gmra.mrb[0].mxu0 %v47
  %v140 = vpop.f32.mrb[0].mxu0
  %v141 = vadd.f32 0.0, %v140
  %v142 = vpop.f32.mrb[0].mxu0
  %v143 = vpop.f32.mrb[0].mxu0
  %v144 = vadd.f32 0.0, %v143
  %v145 = vpop.f32.mrb[0].mxu0
  %146 = vdwg.mxu0
  %v147 = vadd.f32 %v133, %v136
  %v148 = vadd.f32 %v147, %v141
  %v149 = vadd.f32 %v148, %v144
  %v150 = vrot.slane %v149, 4
  %v151 = vadd.f32 %v149, %v150
  %v152 = vrot.slane %v151, 2
  %v153 = vadd.f32 %v151, %v152
  %v154 = vrot.slane %v153, 1
  %v155 = vadd.f32 %v153, %v154
  %v156 = vmul.f32 %v155, 0.03125
  %v157 = vmul.f32 %v133, %v133
  %v158 = vmul.f32 %v136, %v136
  %v159 = vmul.f32 %v141, %v141
  %v160 = vmul.f32 %v144, %v144
  %v161 = vadd.f32 %v157, %v158
  %v162 = vadd.f32 %v161, %v159
  %v163 = vadd.f32 %v162, %v160
  %v164 = vrot.slane %v163, 4
  %v165 = vadd.f32 %v163, %v164
  %v166 = vrot.slane %v165, 2
  %v167 = vadd.f32 %v165, %v166
  %v168 = vrot.slane %v167, 1
  %v169 = vadd.f32 %v167, %v168
  %v170 = vmul.f32 %v169, 0.03125
  %v171 = vmul.f32 %v156, %v156
  %v172 = vsub.f32 %v170, %v171
  %v173 = vadd.f32 %v172, 1e-05
  %v174 = vrsqrt.pop %v173
  %v175 = vld [vmem:[%s2] sm:$0x1]
  %v176 = vmul.f32 %v175, %v174
  %v177 = vld [vmem:[%s2 + $0x1] sm:$0x1]
  %v178 = vmul.f32 %v156, %v176
  %v179 = vsub.f32 %v177, %v178
  %v180 = vlaneseq
  %v181 = vshrl.u32 %v180, 7
  %v182 = vsub.s32 0, %v181
  %v183 = vrot.slane %v176, %v182
  %v184 = vmul.f32 %v133, %v183
  %v185 = vmul.f32 %v136, %v183
  %v186 = vmul.f32 %v141, %v183
  %v187 = vmul.f32 %v144, %v183
  %v188 = vlaneseq
  %v189 = vshrl.u32 %v188, 7
  %v190 = vsub.s32 0, %v189
  %v191 = vrot.slane %v179, %v190
  %v192 = vadd.f32 %v184, %v191
  %v193 = vadd.f32 %v185, %v191
  %v194 = vadd.f32 %v186, %v191
  %v195 = vadd.f32 %v187, %v191
  %v196 = vld [vmem:[%s3] sm:$0xff]
  %v197 = vld [vmem:[%s3 + $0x8] sm:$0xff]
  %v198 = vld [vmem:[%s3 + $0x10] sm:$0xff]
  %v199 = vld [vmem:[%s3 + $0x18] sm:$0xff]
  %v200 = vadd.f32 %v192, %v196
  %v201 = vadd.f32 %v193, %v197
  %v202 = vadd.f32 %v194, %v198
  %v203 = vadd.f32 %v195, %v199
  %204 = vst [vmem:[%s4] sm:$0xff] %v200
  %205 = vst [vmem:[%s4 + $0x8] sm:$0xff] %v201
  %206 = vst [vmem:[%s4 + $0x10] sm:$0xff] %v202
  %207 = vst [vmem:[%s4 + $0x18] sm:$0xff] %v203
  // Predicated region
  $region18: #{forward.9} parent=0 // pred_check
    _
  $region19: #{forward.9} parent=0 // pred_check_branch
    %209 = sbr.rel (0) target = $region21
  $region20: #{forward.9} parent=0 // pred_region
    _
  $region21: #{forward.9} parent=0 // pred_fallthru
    _
  // Predicated region
  $region22: #{forward.9} parent=0 // pred_check
    _
  $region23: #{forward.9} parent=0 // pred_check_branch
    %211 = sbr.rel (0) target = $region25
  $region24: #{forward.9} parent=0 // pred_region
    _
  $region25: #{forward.9} parent=0 // pred_fallthru
    _

// kernel: forward.11
$region0: #{forward.11}
  #allocation0 [shape = 'u32[]', space=smem, size = 0x4, offset = 0x4, fixed_abs, tag = 'smem constant byte address 0x4 - core index']
  #allocation1 [shape = 'u32[144,128]{1,0:T(1,128)}', space=vmem, size = 0x12000, scoped, tag = 'internal scratch']
  %s0 = inlined_call_operand.vmem [shape: bf16[32,128], index: 0, kind: input, shape index: {}]
  %s1 = inlined_call_operand.vmem [shape: bf16[128,128], index: 1, kind: input, shape index: {}]
  %s2 = inlined_call_operand.vmem [shape: f32[2,128], index: 2, kind: input, shape index: {}]
  %s3 = inlined_call_operand.vmem [shape: f32[32,128], index: 3, kind: input, shape index: {}]
  %s4 = inlined_call_operand.hbm [shape: f32[32,128], index: 4, kind: output, shape index: {}]
  %s5 = sld [smem:[#allocation0]]
  $region26: #{forward.11} parent=0
    _
  %s7 = ssub.s32 1, %s5
  %s8 = scalar_select 0, %s7, %s5
  $region1: #{forward.11} parent=0
    #allocation2 [shape = 'u8[16384]{0}', space=vmem, size = 0x4000, scoped, tag = 'output window, operand 0, single buffered']
    #allocation3 [shape = 's32[1]{0}', space=sflag, size = 0x4, scoped, tag = 'scoped memory for forward.11']
    %9 = vsyncpa [#allocation3], 0
    // Predicated region
    $region2: #{forward.11} parent=1 // pred_check
      _
    $region3: #{forward.11} parent=1 // pred_check_branch
      %11 = sbr.rel (0) target = $region5
    $region4: #{forward.11} parent=1 // pred_region
      _
    $region5: #{forward.11} parent=1 // pred_fallthru
      _
    // Predicated region
    $region6: #{forward.11} parent=1 // pred_check
      _
    $region7: #{forward.11} parent=1 // pred_check_branch
      %13 = sbr.rel (0) target = $region9
    $region8: #{forward.11} parent=1 // pred_region
      _
    $region9: #{forward.11} parent=1 // pred_fallthru
      _
    // Predicated region
    $region10: #{forward.11} parent=1 // pred_check
      _
    $region11: #{forward.11} parent=1 // pred_check_branch
      %15 = sbr.rel (0) target = $region13
    $region12: #{forward.11} parent=1 // pred_region
      _
    $region13: #{forward.11} parent=1 // pred_fallthru
      _
    // Predicated region
    $region14: #{forward.11} parent=1 // pred_check
      _
    $region15: #{forward.11} parent=1 // pred_check_branch
      %17 = sbr.rel (0) target = $region17
    $region16: #{forward.11} parent=1 // pred_region
      _
    $region17: #{forward.11} parent=1 // pred_fallthru
      _
    %v19 = vld [vmem:[%s0] sm:$0xf]
    %v20 = vld [vmem:[%s0 + $0x4] sm:$0xf]
    %v21 = vld [vmem:[%s0 + $0x8] sm:$0xf]
    %v22 = vld [vmem:[%s0 + $0xc] sm:$0xf]
    %v23 = vld [vmem:[%s1] sm:$0xf]
    %v24 = vld [vmem:[%s1 + $0x4] sm:$0xf]
    %v25 = vld [vmem:[%s1 + $0x8] sm:$0xf]
    %v26 = vld [vmem:[%s1 + $0xc] sm:$0xf]
    %v27 = vld [vmem:[%s1 + $0x10] sm:$0xf]
    %v28 = vld [vmem:[%s1 + $0x14] sm:$0xf]
    %v29 = vld [vmem:[%s1 + $0x18] sm:$0xf]
    %v30 = vld [vmem:[%s1 + $0x1c] sm:$0xf]
    %v31 = vld [vmem:[%s1 + $0x20] sm:$0xf]
    %v32 = vld [vmem:[%s1 + $0x24] sm:$0xf]
    %v33 = vld [vmem:[%s1 + $0x28] sm:$0xf]
    %v34 = vld [vmem:[%s1 + $0x2c] sm:$0xf]
    %v35 = vld [vmem:[%s1 + $0x30] sm:$0xf]
    %v36 = vld [vmem:[%s1 + $0x34] sm:$0xf]
    %v37 = vld [vmem:[%s1 + $0x38] sm:$0xf]
    %v38 = vld [vmem:[%s1 + $0x3c] sm:$0xf]
    %v43 = vunpack.c.l.b16 %v19
    %v44 = vunpack.c.l.b16 %v20
    %v45 = vunpack.c.l.b16 %v21
    %v46 = vunpack.c.l.b16 %v22
    %v47 = vpack.c.b16 %v44, %v43
    %v48 = vpack.c.b16 %v46, %v45
    %v67 = vunpack.c.l.b16 %v23
    %v68 = vunpack.c.l.b16 %v24
    %v69 = vunpack.c.l.b16 %v25
    %v70 = vunpack.c.l.b16 %v26
    %v71 = vunpack.c.l.b16 %v27
    %v72 = vunpack.c.l.b16 %v28
    %v73 = vunpack.c.l.b16 %v29
    %v74 = vunpack.c.l.b16 %v30
    %v75 = vunpack.c.l.b16 %v31
    %v76 = vunpack.c.l.b16 %v32
    %v77 = vunpack.c.l.b16 %v33
    %v78 = vunpack.c.l.b16 %v34
    %v79 = vunpack.c.l.b16 %v35
    %v80 = vunpack.c.l.b16 %v36
    %v81 = vunpack.c.l.b16 %v37
    %v82 = vunpack.c.l.b16 %v38
    %v83 = vpack.c.b16 %v68, %v67
    %v84 = vpack.c.b16 %v70, %v69
    %v85 = vpack.c.b16 %v72, %v71
    %v86 = vpack.c.b16 %v74, %v73
    %v87 = vpack.c.b16 %v76, %v75
    %v88 = vpack.c.b16 %v78, %v77
    %v89 = vpack.c.b16 %v80, %v79
    %v90 = vpack.c.b16 %v82, %v81
    %99 = vmatprep.subr.bf16.mxu0 0
    %100 = vmatpush1.bf16.msra.mxu0 %v83
    %101 = vmatprep.subr.bf16.mxu0 0
    %102 = vmatpush1.bf16.msra.mxu0 %v84
    %103 = vmatprep.subr.bf16.mxu0 0
    %104 = vmatpush1.bf16.msra.mxu0 %v85
    %105 = vmatprep.subr.bf16.mxu0 0
    %106 = vmatpush1.bf16.msra.mxu0 %v86
    %107 = vmatprep.subr.bf16.mxu0 0
    %108 = vmatpush1.bf16.msra.mxu0 %v87
    %109 = vmatprep.subr.bf16.mxu0 0
    %110 = vmatpush1.bf16.msra.mxu0 %v88
    %111 = vmatprep.subr.bf16.mxu0 0
    %112 = vmatpush1.bf16.msra.mxu0 %v89
    %113 = vmatprep.subr.bf16.mxu0 0
    %114 = vmatpush1.bf16.msra.mxu0 %v90
    %115 = vmatprep.subr.bf16.mxu0 0
    %116 = vmatpush1.bf16.msra.mxu0 0
    %117 = vmatprep.subr.bf16.mxu0 0
    %118 = vmatpush1.bf16.msra.mxu0 0
    %119 = vmatprep.subr.bf16.mxu0 0
    %120 = vmatpush1.bf16.msra.mxu0 0
    %121 = vmatprep.subr.bf16.mxu0 0
    %122 = vmatpush1.bf16.msra.mxu0 0
    %123 = vmatprep.subr.bf16.mxu0 0
    %124 = vmatpush1.bf16.msra.mxu0 0
    %125 = vmatprep.subr.bf16.mxu0 0
    %126 = vmatpush1.bf16.msra.mxu0 0
    %127 = vmatprep.subr.bf16.mxu0 0
    %128 = vmatpush1.bf16.msra.mxu0 0
    %129 = vmatprep.subr.bf16.mxu0 0
    %130 = vmatpush1.bf16.msra.mxu0 0
    %131 = vmatprep.mubr.bf16.mxu0 0
    %132 = vmatmul.mubr.bf16.gmra.mrb[0].mxu0 %v47
    %v133 = vpop.f32.mrb[0].mxu0
    %v134 = vadd.f32 0.0, %v133
    %v135 = vpop.f32.mrb[0].mxu0
    %v136 = vpop.f32.mrb[0].mxu0
    %v137 = vadd.f32 0.0, %v136
    %v138 = vpop.f32.mrb[0].mxu0
    %139 = vmatprep.mubr.bf16.mxu0 0
    %140 = vmatmul.mubr.bf16.gmra.mrb[0].mxu0 %v48
    %v141 = vpop.f32.mrb[0].mxu0
    %v142 = vadd.f32 0.0, %v141
    %v143 = vpop.f32.mrb[0].mxu0
    %v144 = vpop.f32.mrb[0].mxu0
    %v145 = vadd.f32 0.0, %v144
    %v146 = vpop.f32.mrb[0].mxu0
    %147 = vdwg.mxu0
    %v148 = vadd.f32 %v134, %v137
    %v149 = vadd.f32 %v148, %v142
    %v150 = vadd.f32 %v149, %v145
    %v151 = vrot.slane %v150, 4
    %v152 = vadd.f32 %v150, %v151
    %v153 = vrot.slane %v152, 2
    %v154 = vadd.f32 %v152, %v153
    %v155 = vrot.slane %v154, 1
    %v156 = vadd.f32 %v154, %v155
    %v157 = vmul.f32 %v156, 0.03125
    %v158 = vmul.f32 %v134, %v134
    %v159 = vmul.f32 %v137, %v137
    %v160 = vmul.f32 %v142, %v142
    %v161 = vmul.f32 %v145, %v145
    %v162 = vadd.f32 %v158, %v159
    %v163 = vadd.f32 %v162, %v160
    %v164 = vadd.f32 %v163, %v161
    %v165 = vrot.slane %v164, 4
    %v166 = vadd.f32 %v164, %v165
    %v167 = vrot.slane %v166, 2
    %v168 = vadd.f32 %v166, %v167
    %v169 = vrot.slane %v168, 1
    %v170 = vadd.f32 %v168, %v169
    %v171 = vmul.f32 %v170, 0.03125
    %v172 = vmul.f32 %v157, %v157
    %v173 = vsub.f32 %v171, %v172
    %v174 = vadd.f32 %v173, 1e-05
    %v175 = vrsqrt.pop %v174
    %v176 = vld [vmem:[%s2] sm:$0x1]
    %v177 = vmul.f32 %v176, %v175
    %v178 = vld [vmem:[%s2 + $0x1] sm:$0x1]
    %v179 = vmul.f32 %v157, %v177
    %v180 = vsub.f32 %v178, %v179
    %v181 = vlaneseq
    %v182 = vshrl.u32 %v181, 7
    %v183 = vsub.s32 0, %v182
    %v184 = vrot.slane %v177, %v183
    %v185 = vmul.f32 %v134, %v184
    %v186 = vmul.f32 %v137, %v184
    %v187 = vmul.f32 %v142, %v184
    %v188 = vmul.f32 %v145, %v184
    %v189 = vlaneseq
    %v190 = vshrl.u32 %v189, 7
    %v191 = vsub.s32 0, %v190
    %v192 = vrot.slane %v180, %v191
    %v193 = vadd.f32 %v185, %v192
    %v194 = vadd.f32 %v186, %v192
    %v195 = vadd.f32 %v187, %v192
    %v196 = vadd.f32 %v188, %v192
    %v197 = vld [vmem:[%s3] sm:$0xff]
    %v198 = vld [vmem:[%s3 + $0x8] sm:$0xff]
    %v199 = vld [vmem:[%s3 + $0x10] sm:$0xff]
    %v200 = vld [vmem:[%s3 + $0x18] sm:$0xff]
    %v201 = vadd.f32 %v193, %v197
    %v202 = vadd.f32 %v194, %v198
    %v203 = vadd.f32 %v195, %v199
    %v204 = vadd.f32 %v196, %v200
    %205 = vst [vmem:[#allocation2] sm:$0xff] %v201
    %206 = vst [vmem:[#allocation2 + $0x8] sm:$0xff] %v202
    %207 = vst [vmem:[#allocation2 + $0x10] sm:$0xff] %v203
    %208 = vst [vmem:[#allocation2 + $0x18] sm:$0xff] %v204
    // Predicated region
    $region18: #{forward.11} parent=1 // pred_check
      _
    $region19: #{forward.11} parent=1 // pred_check_branch
      %210 = sbr.rel (0) target = $region21
    $region20: #{forward.11} parent=1 // pred_region
      %s212 = ssub.s32 512, 512
      %213 = vsyncadd [#allocation3], %s212
      %s214 = sshll.u32 [#allocation2], 4
      %s215 = int_to_ptr.vmem [resolvable:$true] %s214
      %220 = dma.vmem_to_hbm [thread:$0]  %s215, 512, %s4, [#allocation3], 128, 128, 8
    $region21: #{forward.11} parent=1 // pred_fallthru
      _
    // Predicated region
    $region22: #{forward.11} parent=1 // pred_check
      _
    $region23: #{forward.11} parent=1 // pred_check_branch
      %222 = sbr.rel (0) target = $region25
    $region24: #{forward.11} parent=1 // pred_region
      %223 = dma.done [#allocation3], 512
    $region25: #{forward.11} parent=1 // pred_fallthru
      _
    %224 = vsyncpa [#allocation3], 1

// kernel: forward.8
$region0: #{forward.8}
  #allocation0 [shape = 'u32[]', space=smem, size = 0x4, offset = 0x4, fixed_abs, tag = 'smem constant byte address 0x4 - core index']
  #allocation1 [shape = 'u32[144,128]{1,0:T(1,128)}', space=vmem, size = 0x12000, scoped, tag = 'internal scratch']
  %s0 = inlined_call_operand.vmem [shape: bf16[32,640], index: 0, kind: input, shape index: {}]
  %s1 = inlined_call_operand.vmem [shape: bf16[640,128], index: 1, kind: input, shape index: {}]
  %s2 = inlined_call_operand.vmem [shape: f32[2,128], index: 2, kind: input, shape index: {}]
  %s3 = inlined_call_operand.vmem [shape: f32[32,128], index: 3, kind: output, shape index: {}]
  %s4 = sld [smem:[#allocation0]]
  $region22: #{forward.8} parent=0
    _
  %s6 = ssub.s32 1, %s4
  %s7 = scalar_select 0, %s6, %s4
  // Predicated region
  $region2: #{forward.8} parent=0 // pred_check
    _
  $region3: #{forward.8} parent=0 // pred_check_branch
    %9 = sbr.rel (0) target = $region5
  $region4: #{forward.8} parent=0 // pred_region
    _
  $region5: #{forward.8} parent=0 // pred_fallthru
    _
  // Predicated region
  $region6: #{forward.8} parent=0 // pred_check
    _
  $region7: #{forward.8} parent=0 // pred_check_branch
    %11 = sbr.rel (0) target = $region9
  $region8: #{forward.8} parent=0 // pred_region
    _
  $region9: #{forward.8} parent=0 // pred_fallthru
    _
  // Predicated region
  $region10: #{forward.8} parent=0 // pred_check
    _
  $region11: #{forward.8} parent=0 // pred_check_branch
    %13 = sbr.rel (0) target = $region13
  $region12: #{forward.8} parent=0 // pred_region
    _
  $region13: #{forward.8} parent=0 // pred_fallthru
    _
  %v15 = vld [vmem:[%s0] sm:$0xff]
  %v16 = vld [vmem:[%s0 + $0x8] sm:$0xff]
  %v17 = vld [vmem:[%s0 + $0x10] sm:$0xf]
  %v18 = vld [vmem:[%s0 + $0x14] sm:$0xff]
  %v19 = vld [vmem:[%s0 + $0x1c] sm:$0xff]
  %v20 = vld [vmem:[%s0 + $0x24] sm:$0xf]
  %v21 = vld [vmem:[%s0 + $0x28] sm:$0xff]
  %v22 = vld [vmem:[%s0 + $0x30] sm:$0xff]
  %v23 = vld [vmem:[%s0 + $0x38] sm:$0xf]
  %v24 = vld [vmem:[%s0 + $0x3c] sm:$0xff]
  %v25 = vld [vmem:[%s0 + $0x44] sm:$0xff]
  %v26 = vld [vmem:[%s0 + $0x4c] sm:$0xf]
  %v27 = vld [vmem:[%s1] sm:$0xf]
  %v28 = vld [vmem:[%s1 + $0x4] sm:$0xf]
  %v29 = vld [vmem:[%s1 + $0x8] sm:$0xf]
  %v30 = vld [vmem:[%s1 + $0xc] sm:$0xf]
  %v31 = vld [vmem:[%s1 + $0x10] sm:$0xf]
  %v32 = vld [vmem:[%s1 + $0x14] sm:$0xf]
  %v33 = vld [vmem:[%s1 + $0x18] sm:$0xf]
  %v34 = vld [vmem:[%s1 + $0x1c] sm:$0xf]
  %v35 = vld [vmem:[%s1 + $0x20] sm:$0xf]
  %v36 = vld [vmem:[%s1 + $0x24] sm:$0xf]
  %v37 = vld [vmem:[%s1 + $0x28] sm:$0xf]
  %v38 = vld [vmem:[%s1 + $0x2c] sm:$0xf]
  %v39 = vld [vmem:[%s1 + $0x30] sm:$0xf]
  %v40 = vld [vmem:[%s1 + $0x34] sm:$0xf]
  %v41 = vld [vmem:[%s1 + $0x38] sm:$0xf]
  %v42 = vld [vmem:[%s1 + $0x3c] sm:$0xf]
  %v43 = vld [vmem:[%s1 + $0x40] sm:$0xf]
  %v44 = vld [vmem:[%s1 + $0x44] sm:$0xf]
  %v45 = vld [vmem:[%s1 + $0x48] sm:$0xf]
  %v46 = vld [vmem:[%s1 + $0x4c] sm:$0xf]
  %v47 = vld [vmem:[%s1 + $0x50] sm:$0xf]
  %v48 = vld [vmem:[%s1 + $0x54] sm:$0xf]
  %v49 = vld [vmem:[%s1 + $0x58] sm:$0xf]
  %v50 = vld [vmem:[%s1 + $0x5c] sm:$0xf]
  %v51 = vld [vmem:[%s1 + $0x60] sm:$0xf]
  %v52 = vld [vmem:[%s1 + $0x64] sm:$0xf]
  %v53 = vld [vmem:[%s1 + $0x68] sm:$0xf]
  %v54 = vld [vmem:[%s1 + $0x6c] sm:$0xf]
  %v55 = vld [vmem:[%s1 + $0x70] sm:$0xf]
  %v56 = vld [vmem:[%s1 + $0x74] sm:$0xf]
  %v57 = vld [vmem:[%s1 + $0x78] sm:$0xf]
  %v58 = vld [vmem:[%s1 + $0x7c] sm:$0xf]
  %v59 = vld [vmem:[%s1 + $0x80] sm:$0xf]
  %v60 = vld [vmem:[%s1 + $0x84] sm:$0xf]
  %v61 = vld [vmem:[%s1 + $0x88] sm:$0xf]
  %v62 = vld [vmem:[%s1 + $0x8c] sm:$0xf]
  %v63 = vld [vmem:[%s1 + $0x90] sm:$0xf]
  %v64 = vld [vmem:[%s1 + $0x94] sm:$0xf]
  %v65 = vld [vmem:[%s1 + $0x98] sm:$0xf]
  %v66 = vld [vmem:[%s1 + $0x9c] sm:$0xf]
  %v67 = vld [vmem:[%s1 + $0xa0] sm:$0xf]
  %v68 = vld [vmem:[%s1 + $0xa4] sm:$0xf]
  %v69 = vld [vmem:[%s1 + $0xa8] sm:$0xf]
  %v70 = vld [vmem:[%s1 + $0xac] sm:$0xf]
  %v71 = vld [vmem:[%s1 + $0xb0] sm:$0xf]
  %v72 = vld [vmem:[%s1 + $0xb4] sm:$0xf]
  %v73 = vld [vmem:[%s1 + $0xb8] sm:$0xf]
  %v74 = vld [vmem:[%s1 + $0xbc] sm:$0xf]
  %v75 = vld [vmem:[%s1 + $0xc0] sm:$0xf]
  %v76 = vld [vmem:[%s1 + $0xc4] sm:$0xf]
  %v77 = vld [vmem:[%s1 + $0xc8] sm:$0xf]
  %v78 = vld [vmem:[%s1 + $0xcc] sm:$0xf]
  %v79 = vld [vmem:[%s1 + $0xd0] sm:$0xf]
  %v80 = vld [vmem:[%s1 + $0xd4] sm:$0xf]
  %v81 = vld [vmem:[%s1 + $0xd8] sm:$0xf]
  %v82 = vld [vmem:[%s1 + $0xdc] sm:$0xf]
  %v83 = vld [vmem:[%s1 + $0xe0] sm:$0xf]
  %v84 = vld [vmem:[%s1 + $0xe4] sm:$0xf]
  %v85 = vld [vmem:[%s1 + $0xe8] sm:$0xf]
  %v86 = vld [vmem:[%s1 + $0xec] sm:$0xf]
  %v87 = vld [vmem:[%s1 + $0xf0] sm:$0xf]
  %v88 = vld [vmem:[%s1 + $0xf4] sm:$0xf]
  %v89 = vld [vmem:[%s1 + $0xf8] sm:$0xf]
  %v90 = vld [vmem:[%s1 + $0xfc] sm:$0xf]
  %v91 = vld [vmem:[%s1 + $0x100] sm:$0xf]
  %v92 = vld [vmem:[%s1 + $0x104] sm:$0xf]
  %v93 = vld [vmem:[%s1 + $0x108] sm:$0xf]
  %v94 = vld [vmem:[%s1 + $0x10c] sm:$0xf]
  %v95 = vld [vmem:[%s1 + $0x110] sm:$0xf]
  %v96 = vld [vmem:[%s1 + $0x114] sm:$0xf]
  %v97 = vld [vmem:[%s1 + $0x118] sm:$0xf]
  %v98 = vld [vmem:[%s1 + $0x11c] sm:$0xf]
  %v99 = vld [vmem:[%s1 + $0x120] sm:$0xf]
  %v100 = vld [vmem:[%s1 + $0x124] sm:$0xf]
  %v101 = vld [vmem:[%s1 + $0x128] sm:$0xf]
  %v102 = vld [vmem:[%s1 + $0x12c] sm:$0xf]
  %v103 = vld [vmem:[%s1 + $0x130] sm:$0xf]
  %v104 = vld [vmem:[%s1 + $0x134] sm:$0xf]
  %v105 = vld [vmem:[%s1 + $0x138] sm:$0xf]
  %v106 = vld [vmem:[%s1 + $0x13c] sm:$0xf]
  %v119 = vunpack.c.l.b16 %v15
  %v120 = vunpack.c.h.b16 %v15
  %v121 = vunpack.c.l.b16 %v16
  %v122 = vunpack.c.h.b16 %v16
  %v123 = vunpack.c.l.b16 %v17
  %v124 = vunpack.c.l.b16 %v18
  %v125 = vunpack.c.h.b16 %v18
  %v126 = vunpack.c.l.b16 %v19
  %v127 = vunpack.c.h.b16 %v19
  %v128 = vunpack.c.l.b16 %v20
  %v129 = vunpack.c.l.b16 %v21
  %v130 = vunpack.c.h.b16 %v21
  %v131 = vunpack.c.l.b16 %v22
  %v132 = vunpack.c.h.b16 %v22
  %v133 = vunpack.c.l.b16 %v23
  %v134 = vunpack.c.l.b16 %v24
  %v135 = vunpack.c.h.b16 %v24
  %v136 = vunpack.c.l.b16 %v25
  %v137 = vunpack.c.h.b16 %v25
  %v138 = vunpack.c.l.b16 %v26
  %v139 = vpack.c.b16 %v124, %v119
  %v140 = vpack.c.b16 %v125, %v120
  %v141 = vpack.c.b16 %v126, %v121
  %v142 = vpack.c.b16 %v127, %v122
  %v143 = vpack.c.b16 %v128, %v123
  %v144 = vpack.c.b16 %v134, %v129
  %v145 = vpack.c.b16 %v135, %v130
  %v146 = vpack.c.b16 %v136, %v131
  %v147 = vpack.c.b16 %v137, %v132
  %v148 = vpack.c.b16 %v138, %v133
  %v239 = vunpack.c.l.b16 %v27
  %v240 = vunpack.c.l.b16 %v28
  %v241 = vunpack.c.l.b16 %v29
  %v242 = vunpack.c.l.b16 %v30
  %v243 = vunpack.c.l.b16 %v31
  %v244 = vunpack.c.l.b16 %v32
  %v245 = vunpack.c.l.b16 %v33
  %v246 = vunpack.c.l.b16 %v34
  %v247 = vunpack.c.l.b16 %v35
  %v248 = vunpack.c.l.b16 %v36
  %v249 = vunpack.c.l.b16 %v37
  %v250 = vunpack.c.l.b16 %v38
  %v251 = vunpack.c.l.b16 %v39
  %v252 = vunpack.c.l.b16 %v40
  %v253 = vunpack.c.l.b16 %v41
  %v254 = vunpack.c.l.b16 %v42
  %v255 = vunpack.c.l.b16 %v43
  %v256 = vunpack.c.l.b16 %v44
  %v257 = vunpack.c.l.b16 %v45
  %v258 = vunpack.c.l.b16 %v46
  %v259 = vunpack.c.l.b16 %v47
  %v260 = vunpack.c.l.b16 %v48
  %v261 = vunpack.c.l.b16 %v49
  %v262 = vunpack.c.l.b16 %v50
  %v263 = vunpack.c.l.b16 %v51
  %v264 = vunpack.c.l.b16 %v52
  %v265 = vunpack.c.l.b16 %v53
  %v266 = vunpack.c.l.b16 %v54
  %v267 = vunpack.c.l.b16 %v55
  %v268 = vunpack.c.l.b16 %v56
  %v269 = vunpack.c.l.b16 %v57
  %v270 = vunpack.c.l.b16 %v58
  %v271 = vunpack.c.l.b16 %v59
  %v272 = vunpack.c.l.b16 %v60
  %v273 = vunpack.c.l.b16 %v61
  %v274 = vunpack.c.l.b16 %v62
  %v275 = vunpack.c.l.b16 %v63
  %v276 = vunpack.c.l.b16 %v64
  %v277 = vunpack.c.l.b16 %v65
  %v278 = vunpack.c.l.b16 %v66
  %v279 = vunpack.c.l.b16 %v67
  %v280 = vunpack.c.l.b16 %v68
  %v281 = vunpack.c.l.b16 %v69
  %v282 = vunpack.c.l.b16 %v70
  %v283 = vunpack.c.l.b16 %v71
  %v284 = vunpack.c.l.b16 %v72
  %v285 = vunpack.c.l.b16 %v73
  %v286 = vunpack.c.l.b16 %v74
  %v287 = vunpack.c.l.b16 %v75
  %v288 = vunpack.c.l.b16 %v76
  %v289 = vunpack.c.l.b16 %v77
  %v290 = vunpack.c.l.b16 %v78
  %v291 = vunpack.c.l.b16 %v79
  %v292 = vunpack.c.l.b16 %v80
  %v293 = vunpack.c.l.b16 %v81
  %v294 = vunpack.c.l.b16 %v82
  %v295 = vunpack.c.l.b16 %v83
  %v296 = vunpack.c.l.b16 %v84
  %v297 = vunpack.c.l.b16 %v85
  %v298 = vunpack.c.l.b16 %v86
  %v299 = vunpack.c.l.b16 %v87
  %v300 = vunpack.c.l.b16 %v88
  %v301 = vunpack.c.l.b16 %v89
  %v302 = vunpack.c.l.b16 %v90
  %v303 = vunpack.c.l.b16 %v91
  %v304 = vunpack.c.l.b16 %v92
  %v305 = vunpack.c.l.b16 %v93
  %v306 = vunpack.c.l.b16 %v94
  %v307 = vunpack.c.l.b16 %v95
  %v308 = vunpack.c.l.b16 %v96
  %v309 = vunpack.c.l.b16 %v97
  %v310 = vunpack.c.l.b16 %v98
  %v311 = vunpack.c.l.b16 %v99
  %v312 = vunpack.c.l.b16 %v100
  %v313 = vunpack.c.l.b16 %v101
  %v314 = vunpack.c.l.b16 %v102
  %v315 = vunpack.c.l.b16 %v103
  %v316 = vunpack.c.l.b16 %v104
  %v317 = vunpack.c.l.b16 %v105
  %v318 = vunpack.c.l.b16 %v106
  %v319 = vpack.c.b16 %v240, %v239
  %v320 = vpack.c.b16 %v242, %v241
  %v321 = vpack.c.b16 %v244, %v243
  %v322 = vpack.c.b16 %v246, %v245
  %v323 = vpack.c.b16 %v248, %v247
  %v324 = vpack.c.b16 %v250, %v249
  %v325 = vpack.c.b16 %v252, %v251
  %v326 = vpack.c.b16 %v254, %v253
  %v327 = vpack.c.b16 %v256, %v255
  %v328 = vpack.c.b16 %v258, %v257
  %v329 = vpack.c.b16 %v260, %v259
  %v330 = vpack.c.b16 %v262, %v261
  %v331 = vpack.c.b16 %v264, %v263
  %v332 = vpack.c.b16 %v266, %v265
  %v333 = vpack.c.b16 %v268, %v267
  %v334 = vpack.c.b16 %v270, %v269
  %v335 = vpack.c.b16 %v272, %v271
  %v336 = vpack.c.b16 %v274, %v273
  %v337 = vpack.c.b16 %v276, %v275
  %v338 = vpack.c.b16 %v278, %v277
  %v339 = vpack.c.b16 %v280, %v279
  %v340 = vpack.c.b16 %v282, %v281
  %v341 = vpack.c.b16 %v284, %v283
  %v342 = vpack.c.b16 %v286, %v285
  %v343 = vpack.c.b16 %v288, %v287
  %v344 = vpack.c.b16 %v290, %v289
  %v345 = vpack.c.b16 %v292, %v291
  %v346 = vpack.c.b16 %v294, %v293
  %v347 = vpack.c.b16 %v296, %v295
  %v348 = vpack.c.b16 %v298, %v297
  %v349 = vpack.c.b16 %v300, %v299
  %v350 = vpack.c.b16 %v302, %v301
  %v351 = vpack.c.b16 %v304, %v303
  %v352 = vpack.c.b16 %v306, %v305
  %v353 = vpack.c.b16 %v308, %v307
  %v354 = vpack.c.b16 %v310, %v309
  %v355 = vpack.c.b16 %v312, %v311
  %v356 = vpack.c.b16 %v314, %v313
  %v357 = vpack.c.b16 %v316, %v315
  %v358 = vpack.c.b16 %v318, %v317
  %399 = vmatprep.subr.bf16.mxu0 0
  %400 = vmatpush1.bf16.msra.mxu0 %v319
  %401 = vmatprep.subr.bf16.mxu0 0
  %402 = vmatpush1.bf16.msra.mxu0 %v320
  %403 = vmatprep.subr.bf16.mxu0 0
  %404 = vmatpush1.bf16.msra.mxu0 %v321
  %405 = vmatprep.subr.bf16.mxu0 0
  %406 = vmatpush1.bf16.msra.mxu0 %v322
  %407 = vmatprep.subr.bf16.mxu0 0
  %408 = vmatpush1.bf16.msra.mxu0 %v323
  %409 = vmatprep.subr.bf16.mxu0 0
  %410 = vmatpush1.bf16.msra.mxu0 %v324
  %411 = vmatprep.subr.bf16.mxu0 0
  %412 = vmatpush1.bf16.msra.mxu0 %v325
  %413 = vmatprep.subr.bf16.mxu0 0
  %414 = vmatpush1.bf16.msra.mxu0 %v326
  %415 = vmatprep.subr.bf16.mxu0 0
  %416 = vmatpush1.bf16.msra.mxu0 %v327
  %417 = vmatprep.subr.bf16.mxu0 0
  %418 = vmatpush1.bf16.msra.mxu0 %v328
  %419 = vmatprep.subr.bf16.mxu0 0
  %420 = vmatpush1.bf16.msra.mxu0 %v329
  %421 = vmatprep.subr.bf16.mxu0 0
  %422 = vmatpush1.bf16.msra.mxu0 %v330
  %423 = vmatprep.subr.bf16.mxu0 0
  %424 = vmatpush1.bf16.msra.mxu0 %v331
  %425 = vmatprep.subr.bf16.mxu0 0
  %426 = vmatpush1.bf16.msra.mxu0 %v332
  %427 = vmatprep.subr.bf16.mxu0 0
  %428 = vmatpush1.bf16.msra.mxu0 %v333
  %429 = vmatprep.subr.bf16.mxu0 0
  %430 = vmatpush1.bf16.msra.mxu0 %v334
  %431 = vmatprep.mubr.bf16.mxu0 %v140
  %432 = vmatmul.mubr.bf16.gmra.mrb[0].mxu0 %v139
  %v433 = vpop.f32.mrb[0].mxu0
  %v434 = vadd.f32 0.0, %v433
  %v435 = vpop.f32.mrb[0].mxu0
  %v436 = vpop.f32.mrb[0].mxu0
  %v437 = vadd.f32 0.0, %v436
  %v438 = vpop.f32.mrb[0].mxu0
  %439 = vmatprep.mubr.bf16.mxu0 %v145
  %440 = vmatmul.mubr.bf16.gmra.mrb[0].mxu0 %v144
  %v441 = vpop.f32.mrb[0].mxu0
  %v442 = vadd.f32 0.0, %v441
  %v443 = vpop.f32.mrb[0].mxu0
  %v444 = vpop.f32.mrb[0].mxu0
  %v445 = vadd.f32 0.0, %v444
  %v446 = vpop.f32.mrb[0].mxu0
  %447 = vdwg.mxu0
  %448 = vmatprep.subr.bf16.mxu0 0
  %449 = vmatpush1.bf16.msra.mxu0 %v335
  %450 = vmatprep.subr.bf16.mxu0 0
  %451 = vmatpush1.bf16.msra.mxu0 %v336
  %452 = vmatprep.subr.bf16.mxu0 0
  %453 = vmatpush1.bf16.msra.mxu0 %v337
  %454 = vmatprep.subr.bf16.mxu0 0
  %455 = vmatpush1.bf16.msra.mxu0 %v338
  %456 = vmatprep.subr.bf16.mxu0 0
  %457 = vmatpush1.bf16.msra.mxu0 %v339
  %458 = vmatprep.subr.bf16.mxu0 0
  %459 = vmatpush1.bf16.msra.mxu0 %v340
  %460 = vmatprep.subr.bf16.mxu0 0
  %461 = vmatpush1.bf16.msra.mxu0 %v341
  %462 = vmatprep.subr.bf16.mxu0 0
  %463 = vmatpush1.bf16.msra.mxu0 %v342
  %464 = vmatprep.subr.bf16.mxu0 0
  %465 = vmatpush1.bf16.msra.mxu0 %v343
  %466 = vmatprep.subr.bf16.mxu0 0
  %467 = vmatpush1.bf16.msra.mxu0 %v344
  %468 = vmatprep.subr.bf16.mxu0 0
  %469 = vmatpush1.bf16.msra.mxu0 %v345
  %470 = vmatprep.subr.bf16.mxu0 0
  %471 = vmatpush1.bf16.msra.mxu0 %v346
  %472 = vmatprep.subr.bf16.mxu0 0
  %473 = vmatpush1.bf16.msra.mxu0 %v347
  %474 = vmatprep.subr.bf16.mxu0 0
  %475 = vmatpush1.bf16.msra.mxu0 %v348
  %476 = vmatprep.subr.bf16.mxu0 0
  %477 = vmatpush1.bf16.msra.mxu0 %v349
  %478 = vmatprep.subr.bf16.mxu0 0
  %479 = vmatpush1.bf16.msra.mxu0 %v350
  %480 = vmatprep.mubr.bf16.mxu0 %v142
  %481 = vmatmul.mubr.bf16.gmra.mrb[0].mxu0 %v141
  %v482 = vpop.f32.mrb[0].mxu0
  %v483 = vadd.f32 %v434, %v482
  %v484 = vpop.f32.mrb[0].mxu0
  %v485 = vpop.f32.mrb[0].mxu0
  %v486 = vadd.f32 %v437, %v485
  %v487 = vpop.f32.mrb[0].mxu0
  %488 = vmatprep.mubr.bf16.mxu0 %v147
  %489 = vmatmul.mubr.bf16.gmra.mrb[0].mxu0 %v146
  %v490 = vpop.f32.mrb[0].mxu0
  %v491 = vadd.f32 %v442, %v490
  %v492 = vpop.f32.mrb[0].mxu0
  %v493 = vpop.f32.mrb[0].mxu0
  %v494 = vadd.f32 %v445, %v493
  %v495 = vpop.f32.mrb[0].mxu0
  %496 = vdwg.mxu0
  %497 = vmatprep.subr.bf16.mxu0 0
  %498 = vmatpush1.bf16.msra.mxu0 %v351
  %499 = vmatprep.subr.bf16.mxu0 0
  %500 = vmatpush1.bf16.msra.mxu0 %v352
  %501 = vmatprep.subr.bf16.mxu0 0
  %502 = vmatpush1.bf16.msra.mxu0 %v353
  %503 = vmatprep.subr.bf16.mxu0 0
  %504 = vmatpush1.bf16.msra.mxu0 %v354
  %505 = vmatprep.subr.bf16.mxu0 0
  %506 = vmatpush1.bf16.msra.mxu0 %v355
  %507 = vmatprep.subr.bf16.mxu0 0
  %508 = vmatpush1.bf16.msra.mxu0 %v356
  %509 = vmatprep.subr.bf16.mxu0 0
  %510 = vmatpush1.bf16.msra.mxu0 %v357
  %511 = vmatprep.subr.bf16.mxu0 0
  %512 = vmatpush1.bf16.msra.mxu0 %v358
  %513 = vmatprep.subr.bf16.mxu0 0
  %514 = vmatpush1.bf16.msra.mxu0 0
  %515 = vmatprep.subr.bf16.mxu0 0
  %516 = vmatpush1.bf16.msra.mxu0 0
  %517 = vmatprep.subr.bf16.mxu0 0
  %518 = vmatpush1.bf16.msra.mxu0 0
  %519 = vmatprep.subr.bf16.mxu0 0
  %520 = vmatpush1.bf16.msra.mxu0 0
  %521 = vmatprep.subr.bf16.mxu0 0
  %522 = vmatpush1.bf16.msra.mxu0 0
  %523 = vmatprep.subr.bf16.mxu0 0
  %524 = vmatpush1.bf16.msra.mxu0 0
  %525 = vmatprep.subr.bf16.mxu0 0
  %526 = vmatpush1.bf16.msra.mxu0 0
  %527 = vmatprep.subr.bf16.mxu0 0
  %528 = vmatpush1.bf16.msra.mxu0 0
  %529 = vmatprep.mubr.bf16.mxu0 0
  %530 = vmatmul.mubr.bf16.gmra.mrb[0].mxu0 %v143
  %v531 = vpop.f32.mrb[0].mxu0
  %v532 = vadd.f32 %v483, %v531
  %v533 = vpop.f32.mrb[0].mxu0
  %v534 = vpop.f32.mrb[0].mxu0
  %v535 = vadd.f32 %v486, %v534
  %v536 = vpop.f32.mrb[0].mxu0
  %537 = vmatprep.mubr.bf16.mxu0 0
  %538 = vmatmul.mubr.bf16.gmra.mrb[0].mxu0 %v148
  %v539 = vpop.f32.mrb[0].mxu0
  %v540 = vadd.f32 %v491, %v539
  %v541 = vpop.f32.mrb[0].mxu0
  %v542 = vpop.f32.mrb[0].mxu0
  %v543 = vadd.f32 %v494, %v542
  %v544 = vpop.f32.mrb[0].mxu0
  %545 = vdwg.mxu0
  %v546 = vadd.f32 %v532, %v535
  %v547 = vadd.f32 %v546, %v540
  %v548 = vadd.f32 %v547, %v543
  %v549 = vrot.slane %v548, 4
  %v550 = vadd.f32 %v548, %v549
  %v551 = vrot.slane %v550, 2
  %v552 = vadd.f32 %v550, %v551
  %v553 = vrot.slane %v552, 1
  %v554 = vadd.f32 %v552, %v553
  %v555 = vmul.f32 %v554, 0.03125
  %v556 = vmul.f32 %v532, %v532
  %v557 = vmul.f32 %v535, %v535
  %v558 = vmul.f32 %v540, %v540
  %v559 = vmul.f32 %v543, %v543
  %v560 = vadd.f32 %v556, %v557
  %v561 = vadd.f32 %v560, %v558
  %v562 = vadd.f32 %v561, %v559
  %v563 = vrot.slane %v562, 4
  %v564 = vadd.f32 %v562, %v563
  %v565 = vrot.slane %v564, 2
  %v566 = vadd.f32 %v564, %v565
  %v567 = vrot.slane %v566, 1
  %v568 = vadd.f32 %v566, %v567
  %v569 = vmul.f32 %v568, 0.03125
  %v570 = vmul.f32 %v555, %v555
  %v571 = vsub.f32 %v569, %v570
  %v572 = vadd.f32 %v571, 1e-05
  %v573 = vrsqrt.pop %v572
  %v574 = vld [vmem:[%s2] sm:$0x1]
  %v575 = vmul.f32 %v574, %v573
  %v576 = vld [vmem:[%s2 + $0x1] sm:$0x1]
  %v577 = vmul.f32 %v555, %v575
  %v578 = vsub.f32 %v576, %v577
  %v579 = vlaneseq
  %v580 = vshrl.u32 %v579, 7
  %v581 = vsub.s32 0, %v580
  %v582 = vrot.slane %v575, %v581
  %v583 = vmul.f32 %v532, %v582
  %v584 = vmul.f32 %v535, %v582
  %v585 = vmul.f32 %v540, %v582
  %v586 = vmul.f32 %v543, %v582
  %v587 = vlaneseq
  %v588 = vshrl.u32 %v587, 7
  %v589 = vsub.s32 0, %v588
  %v590 = vrot.slane %v578, %v589
  %v591 = vadd.f32 %v583, %v590
  %v592 = vadd.f32 %v584, %v590
  %v593 = vadd.f32 %v585, %v590
  %v594 = vadd.f32 %v586, %v590
  %v595 = vmax.f32 %v591, 0.0
  %v596 = vmax.f32 %v592, 0.0
  %v597 = vmax.f32 %v593, 0.0
  %v598 = vmax.f32 %v594, 0.0
  %599 = vst [vmem:[%s3] sm:$0xff] %v595
  %600 = vst [vmem:[%s3 + $0x8] sm:$0xff] %v596
  %601 = vst [vmem:[%s3 + $0x10] sm:$0xff] %v597
  %602 = vst [vmem:[%s3 + $0x18] sm:$0xff] %v598
  // Predicated region
  $region14: #{forward.8} parent=0 // pred_check
    _
  $region15: #{forward.8} parent=0 // pred_check_branch
    %604 = sbr.rel (0) target = $region17
  $region16: #{forward.8} parent=0 // pred_region
    _
  $region17: #{forward.8} parent=0 // pred_fallthru
    _
  // Predicated region
  $region18: #{forward.8} parent=0 // pred_check
    _
  $region19: #{forward.8} parent=0 // pred_check_branch
    %606 = sbr.rel (0) target = $region21
  $region20: #{forward.8} parent=0 // pred_region
    _
  $region21: #{forward.8} parent=0 // pred_fallthru
    _

</llo_original>
